<compile_context>
chip_gen: v5e
topology: v5e:2x2
jax: 0.10.0
libtpu: 0.0.40
codegen_flags: <defaults>
</compile_context>

<pallas_src>
import math
import jax
import jax.numpy as jnp
from jax.experimental import pallas as pl
from jax.experimental.pallas import tpu as pltpu

# ----------------------------- configuration --------------------------------
B = 2             # batch
N = 16            # num_nodes
D = 4             # original_dim / input_dim
INPUT_WINDOW = 8  # seq_len of input1
PER_STEP = 6      # time_step
GCN_KS = 3
GCN_C_IN = D
GCN_C_OUT = 8
GRU_H_DIM = 4
S_HALF = PER_STEP // 2                       # 3
GRU_HIDDEN = S_HALF * GRU_H_DIM              # 12
GRU_DIN = PER_STEP * GCN_C_OUT               # 48
N_STEPS = len(range(0, INPUT_WINDOW - PER_STEP + 1, 2))   # 2

# packed-slab row layout (all offsets are multiples of 8 -> free ref views)
STEP_ROWS = 160        # data slab per step:  lk(16) + xin_bd(128) + dcs(16)
WG_ROWS = 136          # gcn  slab per step:  Wstack(128) + bias(8)
WR_ROWS = 408          # gru  slab per step:  wiT(128)+whT(128)+bi(8)+bh(8)+warr(128)+barr(8)
PHY_LANE = 64          # output lanes 64+s hold the per-step phy scalars


# ============================ fused Pallas kernel ============================

def _make_fused_kernel(steps, n):
    """One grid step == one batch: GCN -> GRUCell -> phy for all time steps.

    d_ref  : (steps*STEP_ROWS, 128)  per-batch data slab
    wg_ref : (steps*WG_ROWS , 128)   GCN weights (shared across batches)
    wr_ref : (steps*WR_ROWS , 384)   GRU / arr weights (shared across batches)
    out_ref: (n, 128)                lanes 0:12 = final h, lanes 64+s = phy[s]
    """

    def kernel(d_ref, wg_ref, wr_ref, out_ref):
        h = jnp.zeros((n, 128), jnp.float32)            # lane-padded hidden state
        ones_blk = jnp.ones((n, n), jnp.float32)        # per-batch row-sum via MXU
        phys = []

        for s in range(steps):                          # static unroll (steps == 2)
            db = s * STEP_ROWS
            lk = d_ref[db:db + 16, :]                   # (16,128)  block Chebyshev
            xin = d_ref[db + 16:db + 144, :]            # (128,128) block-diag xin
            dcs = d_ref[db + 144:db + 160, :]           # (16,128)  dep column sums

            gb = s * WG_ROWS
            wstack = wg_ref[gb:gb + 128, :]             # (128,128)
            gcnb = wg_ref[gb + 128:gb + 129, :]         # (1,128)

            rb = s * WR_ROWS
            wiT = wr_ref[rb:rb + 128, :]                # (128,384) gate-padded
            whT = wr_ref[rb + 128:rb + 256, :]          # (128,384)
            bi = wr_ref[rb + 256:rb + 257, :]           # (1,384)
            bh = wr_ref[rb + 264:rb + 265, :]           # (1,384)
            warr = wr_ref[rb + 272:rb + 400, :]         # (128,384)
            barr = wr_ref[rb + 400:rb + 401, :]         # (1,384)

            # ---------------- GCN: 2 matmuls, no lane slices ----------------
            p_all = jnp.dot(xin, wstack, preferred_element_type=jnp.float32)   # (128,128)
            gcn = jnp.maximum(
                jnp.dot(lk, p_all, preferred_element_type=jnp.float32) + gcnb,
                0.0)                                                            # (16,128)
            # TODO(synk): F.dropout(p=0.3) treated as identity (eval mode).

            # ---------------- GRUCell ([r|z|n], each gate in its own lane group) ----
            gi = jnp.dot(gcn, wiT, preferred_element_type=jnp.float32) + bi    # (16,384)
            gg = jnp.dot(h, whT, preferred_element_type=jnp.float32) + bh      # (16,384)
            r = jax.nn.sigmoid(gi[:, 0:128] + gg[:, 0:128])
            z = jax.nn.sigmoid(gi[:, 128:256] + gg[:, 128:256])
            cand = jnp.tanh(gi[:, 256:384] + r * gg[:, 256:384])
            h = (1.0 - z) * cand + z * h                                        # (16,128)

            # ---------------- phy: sum_s rowsum(dep @ a1 a2^T) ----------------
            arr = jax.nn.sigmoid(
                jnp.dot(h, warr, preferred_element_type=jnp.float32) + barr)    # (16,384)
            a1 = arr[:, 0:128]
            a2 = arr[:, 128:256]
            scal = jnp.dot(ones_blk, dcs * a1,
                           preferred_element_type=jnp.float32)                  # (16,128)
            phys.append(jnp.sum(a2 * scal, axis=1, keepdims=True))              # (16,1)

        # single lane-dense output store
        lane = jax.lax.broadcasted_iota(jnp.int32, (n, 128), 1)
        out = h
        for s in range(steps):
            out = jnp.where(lane == PHY_LANE + s, phys[s], out)
        out_ref[...] = out

    return kernel


# ============================ plain-JAX glue =================================

def time_attention(inputs, agg_w, agg_b, time_w, time_b):
    """inputs: (B, T, N, D) -> attention weights (B, T//2, N)"""
    agg = jnp.einsum('btnd,d->btn', inputs, agg_w[0]) + agg_b[0]
    agg = jax.nn.relu(agg)                              # (B, T, N)
    agg = jnp.transpose(agg, (0, 2, 1))                 # (B, N, T)
    taw = jnp.einsum('bnt,st->bns', agg, time_w) + time_b
    taw = jax.nn.softmax(taw, axis=-1)                  # (B, N, T)
    pairs = taw[..., 0::2] + taw[..., 1::2]             # (B, N, T//2)
    return jnp.transpose(pairs, (0, 2, 1))              # (B, T//2, N)


def _lambda_max_power(L, iters=64):
    """On-device dominant-eigenvalue estimate via power iteration."""
    m, n, _ = L.shape
    v0 = jnp.full((m, n), 1.0 / jnp.sqrt(n), L.dtype)

    def body(_, v):
        w = jnp.einsum('bij,bj->bi', L, v)
        nrm = jnp.sqrt(jnp.sum(w * w, axis=-1, keepdims=True))
        return w / jnp.maximum(nrm, 1e-12)

    v = jax.lax.fori_loop(0, iters, body, v0)
    Lv = jnp.einsum('bij,bj->bi', L, v)
    return jnp.sum(v * Lv, axis=-1) / jnp.maximum(jnp.sum(v * v, axis=-1), 1e-12)


def cheb_poly(L, Ks):
    bm, n, _ = L.shape
    L0 = jnp.broadcast_to(jnp.eye(n, dtype=L.dtype), (bm, n, n))
    L1 = L
    Ls = [L0, L1]
    for _ in range(Ks - 2):
        Ln = 2.0 * jnp.matmul(L, L1) - L0
        Ls.append(Ln)
        L0, L1 = L1, Ln
    return jnp.stack(Ls, axis=1)                         # (bm, Ks, N, N)


@jax.jit
def pigwn_forward(params, input1, input2, support):
    b, seq_len, n, d = input1.shape
    cells = params['phy']
    steps = len(cells)
    T, S, gh, c_out, ks = PER_STEP, S_HALF, GRU_H_DIM, GCN_C_OUT, GCN_KS
    H = S * gh
    eye_n = jnp.eye(n, dtype=jnp.float32)

    # ---- per-step graph construction (tiny XLA ops, all under one jit) ----
    graphs, in1_slices, in2_slices = [], [], []
    for si in range(steps):
        t1 = 2 * si
        in1 = input1[:, t1:t1 + T]                       # (B, T, N, D)
        in2 = input2[:, t1 // 2:t1 // 2 + S]             # (B, S, N, N)
        in1_slices.append(in1)
        in2_slices.append(in2)
        p = cells[si]
        attw = time_attention(in1, p['agg_w'], p['agg_b'],
                              p['time_w'], p['time_b'])[..., None]    # (B, S, N, 1)
        g = jnp.sum(in2 * attw, axis=1)                               # (B, N, N)
        norm = jnp.maximum(jnp.sum(jnp.abs(g), axis=1, keepdims=True), 1e-12)
        g = g / norm + eye_n[None] + support[None]
        graphs.append(g)

    # ---- scaled Laplacian, lambda_max ON DEVICE (power iteration) ----
    G = jnp.stack(graphs, 0).reshape(steps * b, n, n)
    dd = jnp.sum(G, axis=2)
    L = -G * (1.0 - eye_n) + eye_n * dd[:, :, None]
    L = L / jnp.sqrt(dd[:, :, None] * dd[:, None, :])
    lam = _lambda_max_power(L)
    Lhat = 2.0 * L / lam[:, None, None] - eye_n
    Lk = cheb_poly(Lhat, ks).reshape(steps, b, ks, n, n)

    in1_all = jnp.stack(in1_slices, 0)                   # (steps, B, T, N, D)
    in2_all = jnp.stack(in2_slices, 0)                   # (steps, B, S, N, N)

    # ---- slab 1: per-batch data (block Chebyshev, block-diag xin, dep colsums) ----
    lk_blk = jnp.transpose(Lk, (0, 1, 3, 2, 4)).reshape(steps, b, n, ks * n)
    lk_pad = jnp.pad(lk_blk, ((0, 0), (0, 0), (0, 0), (0, 128 - ks * n)))

    xin = jnp.transpose(in1_all, (0, 1, 3, 4, 2)).reshape(steps, b, n, d * T)
    eye_k = jnp.eye(ks, dtype=jnp.float32)
    xin_bd = jnp.einsum('sbmc,kl->sbkmlc', xin, eye_k).reshape(
        steps, b, ks * n, ks * d * T)                                   # (2,2,48,72)
    xin_bd = jnp.pad(xin_bd, ((0, 0), (0, 0), (0, 128 - ks * n), (0, 128 - ks * d * T)))

    dcs = jnp.transpose(jnp.sum(in2_all, axis=3), (0, 1, 3, 2))         # (steps,B,N,S)
    dcs_pad = jnp.pad(dcs, ((0, 0), (0, 0), (0, 0), (0, 128 - S)))

    data = jnp.concatenate([lk_pad, xin_bd, dcs_pad], axis=2)           # (steps,B,160,128)
    data = jnp.transpose(data, (1, 0, 2, 3)).reshape(b, steps * STEP_ROWS, 128)

    # ---- slabs 2/3: packed weights (lane-dense, gate-padded) ----
    eye_t = jnp.eye(T, dtype=jnp.float32)
    eye_s = jnp.eye(S, dtype=jnp.float32)
    wg_list, wr_list = [], []
    for si in range(steps):
        p = cells[si]
        # GCN block weights: Wk[i*T+t', t*c_out+o] = theta[i,o,k] * delta(t'==t)
        wks = [jnp.einsum('io,ab->iabo', p['theta'][:, :, k], eye_t).reshape(d * T, T * c_out)
               for k in range(ks)]
        wstack = jnp.concatenate(wks, axis=0)                           # (72,48)
        wstack = jnp.pad(wstack, ((0, 128 - ks * d * T), (0, 128 - T * c_out)))
        gcnb = jnp.tile(p['gcn_b'], (T,)).reshape(1, T * c_out)
        gcnb = jnp.pad(gcnb, ((0, 7), (0, 128 - T * c_out)))            # (8,128)
        wg_list.append(jnp.concatenate([wstack, gcnb], axis=0))         # (136,128)

        # GRU weights, each gate padded to its own 128-lane group
        wiT = jnp.pad(p['w_ih'].T.reshape(T * c_out, 3, H),
                      ((0, 0), (0, 0), (0, 128 - H))).reshape(T * c_out, 384)
        wiT = jnp.pad(wiT, ((0, 128 - T * c_out), (0, 0)))              # (128,384)
        whT = jnp.pad(p['w_hh'].T.reshape(H, 3, H),
                      ((0, 0), (0, 0), (0, 128 - H))).reshape(H, 384)
        whT = jnp.pad(whT, ((0, 128 - H), (0, 0)))                      # (128,384)
        bi = jnp.pad(p['b_ih'].reshape(3, H), ((0, 0), (0, 128 - H))).reshape(1, 384)
        bi = jnp.pad(bi, ((0, 7), (0, 0)))                              # (8,384)
        bh = jnp.pad(p['b_hh'].reshape(3, H), ((0, 0), (0, 128 - H))).reshape(1, 384)
        bh = jnp.pad(bh, ((0, 7), (0, 0)))                              # (8,384)
        # arr weights: a1 columns in lane group 0, a2 columns in lane group 1
        a1w = jnp.einsum('g,ab->agb', p['arr_w'][0], eye_s).reshape(H, S)
        a2w = jnp.einsum('g,ab->agb', p['arr_w'][1], eye_s).reshape(H, S)
        warr = jnp.concatenate([jnp.pad(a1w, ((0, 0), (0, 128 - S))),
                                jnp.pad(a2w, ((0, 0), (0, 128 - S)))], axis=1)  # (12,256)
        warr = jnp.pad(warr, ((0, 128 - H), (0, 384 - 256)))             # (128,384)
        barr = jnp.concatenate([jnp.broadcast_to(p['arr_b'][0], (1, S)),
                                jnp.zeros((1, 128 - S), jnp.float32),
                                jnp.broadcast_to(p['arr_b'][1], (1, S)),
                                jnp.zeros((1, 384 - 128 - S), jnp.float32)], axis=1)
        barr = jnp.pad(barr, ((0, 7), (0, 0)))                           # (8,384)
        wr_list.append(jnp.concatenate([wiT, whT, bi, bh, warr, barr], axis=0))  # (408,384)

    wgcn = jnp.concatenate(wg_list, axis=0)              # (steps*136, 128)
    wgru = jnp.concatenate(wr_list, axis=0)              # (steps*408, 384)

    # ---- fused kernel: grid over batches (parallel -> both TCs on v7x) ----
    kernel = _make_fused_kernel(steps, n)
    out = pl.pallas_call(
        kernel,
        out_shape=jax.ShapeDtypeStruct((b, n, 128), jnp.float32),
        grid=(b,),
        in_specs=[
            pl.BlockSpec((None, steps * STEP_ROWS, 128), lambda i: (i, 0, 0)),
            pl.BlockSpec((steps * WG_ROWS, 128), lambda i: (0, 0)),
            pl.BlockSpec((steps * WR_ROWS, 384), lambda i: (0, 0)),
        ],
        out_specs=pl.BlockSpec((None, n, 128), lambda i: (i, 0, 0)),
        compiler_params=pltpu.CompilerParams(dimension_semantics=("parallel",)),
    )(data, wgcn, wgru)

    h_final = out[:, :, :H].reshape(b * n, H)                            # (B*N, 12)
    stacked_phy = jnp.transpose(out[:, :, PHY_LANE:PHY_LANE + steps], (0, 2, 1))  # (B, steps, N)

    # ---- final linear on the carried hidden state ----
    h1p = jnp.transpose(h_final.reshape(b, n, S, gh), (0, 1, 3, 2))      # (B, N, gh, S)
    proj = jnp.einsum('bngs,ws->bngw', h1p, params['final_w']) + params['final_b']
    h_proj = jnp.transpose(proj, (0, 3, 1, 2))                           # (B, T_in, N, gh)
    stacked_input = jnp.concatenate((input1, h_proj), axis=-1)           # (B, T_in, N, D+gh)
    # TODO(synk): GWNET definition not provided; returning its input in place of dl_result.
    return stacked_input, stacked_phy


# ============================ parameter init =================================

def _u(key, shape, bound):
    return jax.random.uniform(key, shape, jnp.float32, -bound, bound)


def init_phycell_params(key):
    ks = jax.random.split(key, 12)
    fan_theta = GCN_C_OUT * GCN_KS
    return dict(
        agg_w=_u(ks[0], (1, D), 1.0 / math.sqrt(D)),
        agg_b=_u(ks[1], (1,), 1.0 / math.sqrt(D)),
        time_w=_u(ks[2], (PER_STEP, PER_STEP), 1.0 / math.sqrt(PER_STEP)),
        time_b=_u(ks[3], (PER_STEP,), 1.0 / math.sqrt(PER_STEP)),
        theta=_u(ks[4], (GCN_C_IN, GCN_C_OUT, GCN_KS), 1.0 / math.sqrt(fan_theta)),
        gcn_b=_u(ks[5], (GCN_C_OUT,), 1.0 / math.sqrt(fan_theta)),
        w_ih=_u(ks[6], (3 * GRU_HIDDEN, GRU_DIN), 1.0 / math.sqrt(GRU_HIDDEN)),
        w_hh=_u(ks[7], (3 * GRU_HIDDEN, GRU_HIDDEN), 1.0 / math.sqrt(GRU_HIDDEN)),
        b_ih=_u(ks[8], (3 * GRU_HIDDEN,), 1.0 / math.sqrt(GRU_HIDDEN)),
        b_hh=_u(ks[9], (3 * GRU_HIDDEN,), 1.0 / math.sqrt(GRU_HIDDEN)),
        arr_w=_u(ks[10], (2, GRU_H_DIM), 1.0 / math.sqrt(GRU_H_DIM)),
        arr_b=_u(ks[11], (2,), 1.0 / math.sqrt(GRU_H_DIM)),
    )


def init_pigwn_params(key):
    keys = jax.random.split(key, N_STEPS + 2)
    return dict(
        phy=[init_phycell_params(keys[i]) for i in range(N_STEPS)],
        final_w=_u(keys[-2], (INPUT_WINDOW, S_HALF), 1.0 / math.sqrt(S_HALF)),
        final_b=_u(keys[-1], (INPUT_WINDOW,), 1.0 / math.sqrt(S_HALF)),
    )


# ================================== main =====================================

if __name__ == "__main__":
    key = jax.random.PRNGKey(0)
    k1, k2, k3, kp = jax.random.split(key, 4)

    input1 = jax.random.normal(k1, (B, INPUT_WINDOW, N, D), jnp.float32)
    input2 = jax.random.uniform(k2, (B, INPUT_WINDOW // 2, N, N), jnp.float32,
                                minval=0.0, maxval=1.0)
    support = jax.random.uniform(k3, (N, N), jnp.float32, minval=0.0, maxval=1.0)

    params = init_pigwn_params(kp)

    stacked_input, stacked_phy = pigwn_forward(params, input1, input2, support)
    jax.block_until_ready(stacked_input)
    jax.block_until_ready(stacked_phy)

    assert stacked_input.shape == (B, INPUT_WINDOW, N, D + GRU_H_DIM)
    assert stacked_phy.shape == (B, N_STEPS, N)
    assert bool(jnp.all(jnp.isfinite(stacked_input)))
    assert bool(jnp.all(jnp.isfinite(stacked_phy)))
    print("KERNEL_OK")
</pallas_src>

<mosaic_0001>
module attributes {stable_mosaic.version = 11 : i64} {
  func.func @kernel(%arg0: i32, %arg1: memref<1x320x128xf32, #tpu.memory_space<vmem>>, %arg2: memref<272x128xf32, #tpu.memory_space<vmem>>, %arg3: memref<816x384xf32, #tpu.memory_space<vmem>>, %arg4: memref<1x16x128xf32, #tpu.memory_space<vmem>>) attributes {dimension_semantics = [#tpu.dimension_semantics<parallel>], iteration_bounds = array<i64: 2>, scalar_prefetch = 0 : i64, scratch_operands = 0 : i64, tpu.core_type = #tpu.core_type<tc>, window_params = [{transform_indices = @transform_0, window_bounds = array<i64: 1, 320, 128>}, {pipeline_mode = #tpu.pipeline_mode<synchronous>, transform_indices = @transform_1, window_bounds = array<i64: 272, 128>}, {pipeline_mode = #tpu.pipeline_mode<synchronous>, transform_indices = @transform_2, window_bounds = array<i64: 816, 384>}, {transform_indices = @transform_3, window_bounds = array<i64: 1, 16, 128>}]} {
    %cst = arith.constant 0.000000e+00 : f32
    %0 = vector.broadcast %cst : f32 to vector<16x128xf32>
    %cst_0 = arith.constant 1.000000e+00 : f32
    %1 = vector.broadcast %cst_0 : f32 to vector<16x16xf32>
    %c0 = arith.constant 0 : index
    %c0_1 = arith.constant 0 : index
    %c0_2 = arith.constant 0 : index
    %2 = vector.load %arg1[%c0, %c0_1, %c0_2] : memref<1x320x128xf32, #tpu.memory_space<vmem>>, vector<1x16x128xf32>
    %3 = vector.shape_cast %2 : vector<1x16x128xf32> to vector<16x128xf32>
    %c0_3 = arith.constant 0 : index
    %c16 = arith.constant 16 : index
    %c0_4 = arith.constant 0 : index
    %4 = vector.load %arg1[%c0_3, %c16, %c0_4] : memref<1x320x128xf32, #tpu.memory_space<vmem>>, vector<1x128x128xf32>
    %5 = vector.shape_cast %4 : vector<1x128x128xf32> to vector<128x128xf32>
    %c0_5 = arith.constant 0 : index
    %c144 = arith.constant 144 : index
    %c0_6 = arith.constant 0 : index
    %6 = vector.load %arg1[%c0_5, %c144, %c0_6] : memref<1x320x128xf32, #tpu.memory_space<vmem>>, vector<1x16x128xf32>
    %7 = vector.shape_cast %6 : vector<1x16x128xf32> to vector<16x128xf32>
    %c0_7 = arith.constant 0 : index
    %c0_8 = arith.constant 0 : index
    %8 = vector.load %arg2[%c0_7, %c0_8] : memref<272x128xf32, #tpu.memory_space<vmem>>, vector<128x128xf32>
    %c128 = arith.constant 128 : index
    %c0_9 = arith.constant 0 : index
    %9 = vector.load %arg2[%c128, %c0_9] : memref<272x128xf32, #tpu.memory_space<vmem>>, vector<1x128xf32>
    %c0_10 = arith.constant 0 : index
    %c0_11 = arith.constant 0 : index
    %10 = vector.load %arg3[%c0_10, %c0_11] : memref<816x384xf32, #tpu.memory_space<vmem>>, vector<128x384xf32>
    %c128_12 = arith.constant 128 : index
    %c0_13 = arith.constant 0 : index
    %11 = vector.load %arg3[%c128_12, %c0_13] : memref<816x384xf32, #tpu.memory_space<vmem>>, vector<128x384xf32>
    %c256 = arith.constant 256 : index
    %c0_14 = arith.constant 0 : index
    %12 = vector.load %arg3[%c256, %c0_14] : memref<816x384xf32, #tpu.memory_space<vmem>>, vector<1x384xf32>
    %c264 = arith.constant 264 : index
    %c0_15 = arith.constant 0 : index
    %13 = vector.load %arg3[%c264, %c0_15] : memref<816x384xf32, #tpu.memory_space<vmem>>, vector<1x384xf32>
    %c272 = arith.constant 272 : index
    %c0_16 = arith.constant 0 : index
    %14 = vector.load %arg3[%c272, %c0_16] : memref<816x384xf32, #tpu.memory_space<vmem>>, vector<128x384xf32>
    %c400 = arith.constant 400 : index
    %c0_17 = arith.constant 0 : index
    %15 = vector.load %arg3[%c400, %c0_17] : memref<816x384xf32, #tpu.memory_space<vmem>>, vector<1x384xf32>
    %cst_18 = arith.constant dense<0.000000e+00> : vector<128x128xf32>
    %16 = tpu.matmul %5, %8, %cst_18 {dimension_numbers = #tpu.dot_dimension_numbers<[1], [0], [0], [1], [0, 0, 1, 1], [], []>} : vector<128x128xf32>, vector<128x128xf32>, vector<128x128xf32> -> vector<128x128xf32>
    %cst_19 = arith.constant dense<0.000000e+00> : vector<16x128xf32>
    %17 = tpu.matmul %3, %16, %cst_19 {dimension_numbers = #tpu.dot_dimension_numbers<[1], [0], [0], [1], [0, 0, 1, 1], [], []>} : vector<16x128xf32>, vector<128x128xf32>, vector<16x128xf32> -> vector<16x128xf32>
    %18 = vector.broadcast %9 : vector<1x128xf32> to vector<16x128xf32>
    %19 = arith.addf %17, %18 : vector<16x128xf32>
    %cst_20 = arith.constant 0.000000e+00 : f32
    %20 = vector.broadcast %cst_20 : f32 to vector<16x128xf32>
    %21 = arith.maximumf %19, %20 : vector<16x128xf32>
    %cst_21 = arith.constant dense<0.000000e+00> : vector<16x384xf32>
    %22 = tpu.matmul %21, %10, %cst_21 {dimension_numbers = #tpu.dot_dimension_numbers<[1], [0], [0], [1], [0, 0, 1, 1], [], []>} : vector<16x128xf32>, vector<128x384xf32>, vector<16x384xf32> -> vector<16x384xf32>
    %23 = vector.broadcast %12 : vector<1x384xf32> to vector<16x384xf32>
    %24 = arith.addf %22, %23 : vector<16x384xf32>
    %cst_22 = arith.constant dense<0.000000e+00> : vector<16x384xf32>
    %25 = tpu.matmul %0, %11, %cst_22 {dimension_numbers = #tpu.dot_dimension_numbers<[1], [0], [0], [1], [0, 0, 1, 1], [], []>} : vector<16x128xf32>, vector<128x384xf32>, vector<16x384xf32> -> vector<16x384xf32>
    %26 = vector.broadcast %13 : vector<1x384xf32> to vector<16x384xf32>
    %27 = arith.addf %25, %26 : vector<16x384xf32>
    %28 = vector.extract_strided_slice %24 {offsets = [0, 0], sizes = [16, 128], strides = [1, 1]} : vector<16x384xf32> to vector<16x128xf32>
    %29 = vector.extract_strided_slice %27 {offsets = [0, 0], sizes = [16, 128], strides = [1, 1]} : vector<16x384xf32> to vector<16x128xf32>
    %30 = arith.addf %28, %29 : vector<16x128xf32>
    %31 = arith.negf %30 : vector<16x128xf32>
    %32 = math.exp %31 : vector<16x128xf32>
    %cst_23 = arith.constant 1.000000e+00 : f32
    %33 = vector.broadcast %cst_23 : f32 to vector<16x128xf32>
    %34 = arith.addf %33, %32 : vector<16x128xf32>
    %35 = arith.divf %33, %34 : vector<16x128xf32>
    %36 = vector.extract_strided_slice %24 {offsets = [0, 128], sizes = [16, 128], strides = [1, 1]} : vector<16x384xf32> to vector<16x128xf32>
    %37 = vector.extract_strided_slice %27 {offsets = [0, 128], sizes = [16, 128], strides = [1, 1]} : vector<16x384xf32> to vector<16x128xf32>
    %38 = arith.addf %36, %37 : vector<16x128xf32>
    %39 = arith.negf %38 : vector<16x128xf32>
    %40 = math.exp %39 : vector<16x128xf32>
    %cst_24 = arith.constant 1.000000e+00 : f32
    %41 = vector.broadcast %cst_24 : f32 to vector<16x128xf32>
    %42 = arith.addf %41, %40 : vector<16x128xf32>
    %43 = arith.divf %41, %42 : vector<16x128xf32>
    %44 = vector.extract_strided_slice %24 {offsets = [0, 256], sizes = [16, 128], strides = [1, 1]} : vector<16x384xf32> to vector<16x128xf32>
    %45 = vector.extract_strided_slice %27 {offsets = [0, 256], sizes = [16, 128], strides = [1, 1]} : vector<16x384xf32> to vector<16x128xf32>
    %46 = arith.mulf %35, %45 : vector<16x128xf32>
    %47 = arith.addf %44, %46 : vector<16x128xf32>
    %48 = math.tanh %47 : vector<16x128xf32>
    %cst_25 = arith.constant 1.000000e+00 : f32
    %49 = vector.broadcast %cst_25 : f32 to vector<16x128xf32>
    %50 = arith.subf %49, %43 : vector<16x128xf32>
    %51 = arith.mulf %50, %48 : vector<16x128xf32>
    %52 = arith.mulf %43, %0 : vector<16x128xf32>
    %53 = arith.addf %51, %52 : vector<16x128xf32>
    %cst_26 = arith.constant dense<0.000000e+00> : vector<16x384xf32>
    %54 = tpu.matmul %53, %14, %cst_26 {dimension_numbers = #tpu.dot_dimension_numbers<[1], [0], [0], [1], [0, 0, 1, 1], [], []>} : vector<16x128xf32>, vector<128x384xf32>, vector<16x384xf32> -> vector<16x384xf32>
    %55 = vector.broadcast %15 : vector<1x384xf32> to vector<16x384xf32>
    %56 = arith.addf %54, %55 : vector<16x384xf32>
    %57 = arith.negf %56 : vector<16x384xf32>
    %58 = math.exp %57 : vector<16x384xf32>
    %cst_27 = arith.constant 1.000000e+00 : f32
    %59 = vector.broadcast %cst_27 : f32 to vector<16x384xf32>
    %60 = arith.addf %59, %58 : vector<16x384xf32>
    %61 = arith.divf %59, %60 : vector<16x384xf32>
    %62 = vector.extract_strided_slice %61 {offsets = [0, 0], sizes = [16, 128], strides = [1, 1]} : vector<16x384xf32> to vector<16x128xf32>
    %63 = vector.extract_strided_slice %61 {offsets = [0, 128], sizes = [16, 128], strides = [1, 1]} : vector<16x384xf32> to vector<16x128xf32>
    %64 = arith.mulf %7, %62 : vector<16x128xf32>
    %cst_28 = arith.constant dense<0.000000e+00> : vector<16x128xf32>
    %65 = tpu.matmul %1, %64, %cst_28 {dimension_numbers = #tpu.dot_dimension_numbers<[1], [0], [0], [1], [0, 0, 1, 1], [], []>} : vector<16x16xf32>, vector<16x128xf32>, vector<16x128xf32> -> vector<16x128xf32>
    %66 = arith.mulf %63, %65 : vector<16x128xf32>
    %cst_29 = arith.constant dense<0.000000e+00> : vector<16xf32>
    %67 = vector.multi_reduction <add>, %66, %cst_29 [1] : vector<16x128xf32> to vector<16xf32>
    %68 = vector.shape_cast %67 : vector<16xf32> to vector<16x1xf32>
    %c0_30 = arith.constant 0 : index
    %c160 = arith.constant 160 : index
    %c0_31 = arith.constant 0 : index
    %69 = vector.load %arg1[%c0_30, %c160, %c0_31] : memref<1x320x128xf32, #tpu.memory_space<vmem>>, vector<1x16x128xf32>
    %70 = vector.shape_cast %69 : vector<1x16x128xf32> to vector<16x128xf32>
    %c0_32 = arith.constant 0 : index
    %c176 = arith.constant 176 : index
    %c0_33 = arith.constant 0 : index
    %71 = vector.load %arg1[%c0_32, %c176, %c0_33] : memref<1x320x128xf32, #tpu.memory_space<vmem>>, vector<1x128x128xf32>
    %72 = vector.shape_cast %71 : vector<1x128x128xf32> to vector<128x128xf32>
    %c0_34 = arith.constant 0 : index
    %c304 = arith.constant 304 : index
    %c0_35 = arith.constant 0 : index
    %73 = vector.load %arg1[%c0_34, %c304, %c0_35] : memref<1x320x128xf32, #tpu.memory_space<vmem>>, vector<1x16x128xf32>
    %74 = vector.shape_cast %73 : vector<1x16x128xf32> to vector<16x128xf32>
    %c136 = arith.constant 136 : index
    %c0_36 = arith.constant 0 : index
    %75 = vector.load %arg2[%c136, %c0_36] : memref<272x128xf32, #tpu.memory_space<vmem>>, vector<128x128xf32>
    %c264_37 = arith.constant 264 : index
    %c0_38 = arith.constant 0 : index
    %76 = vector.load %arg2[%c264_37, %c0_38] : memref<272x128xf32, #tpu.memory_space<vmem>>, vector<1x128xf32>
    %c408 = arith.constant 408 : index
    %c0_39 = arith.constant 0 : index
    %77 = vector.load %arg3[%c408, %c0_39] : memref<816x384xf32, #tpu.memory_space<vmem>>, vector<128x384xf32>
    %c536 = arith.constant 536 : index
    %c0_40 = arith.constant 0 : index
    %78 = vector.load %arg3[%c536, %c0_40] : memref<816x384xf32, #tpu.memory_space<vmem>>, vector<128x384xf32>
    %c664 = arith.constant 664 : index
    %c0_41 = arith.constant 0 : index
    %79 = vector.load %arg3[%c664, %c0_41] : memref<816x384xf32, #tpu.memory_space<vmem>>, vector<1x384xf32>
    %c672 = arith.constant 672 : index
    %c0_42 = arith.constant 0 : index
    %80 = vector.load %arg3[%c672, %c0_42] : memref<816x384xf32, #tpu.memory_space<vmem>>, vector<1x384xf32>
    %c680 = arith.constant 680 : index
    %c0_43 = arith.constant 0 : index
    %81 = vector.load %arg3[%c680, %c0_43] : memref<816x384xf32, #tpu.memory_space<vmem>>, vector<128x384xf32>
    %c808 = arith.constant 808 : index
    %c0_44 = arith.constant 0 : index
    %82 = vector.load %arg3[%c808, %c0_44] : memref<816x384xf32, #tpu.memory_space<vmem>>, vector<1x384xf32>
    %cst_45 = arith.constant dense<0.000000e+00> : vector<128x128xf32>
    %83 = tpu.matmul %72, %75, %cst_45 {dimension_numbers = #tpu.dot_dimension_numbers<[1], [0], [0], [1], [0, 0, 1, 1], [], []>} : vector<128x128xf32>, vector<128x128xf32>, vector<128x128xf32> -> vector<128x128xf32>
    %cst_46 = arith.constant dense<0.000000e+00> : vector<16x128xf32>
    %84 = tpu.matmul %70, %83, %cst_46 {dimension_numbers = #tpu.dot_dimension_numbers<[1], [0], [0], [1], [0, 0, 1, 1], [], []>} : vector<16x128xf32>, vector<128x128xf32>, vector<16x128xf32> -> vector<16x128xf32>
    %85 = vector.broadcast %76 : vector<1x128xf32> to vector<16x128xf32>
    %86 = arith.addf %84, %85 : vector<16x128xf32>
    %cst_47 = arith.constant 0.000000e+00 : f32
    %87 = vector.broadcast %cst_47 : f32 to vector<16x128xf32>
    %88 = arith.maximumf %86, %87 : vector<16x128xf32>
    %cst_48 = arith.constant dense<0.000000e+00> : vector<16x384xf32>
    %89 = tpu.matmul %88, %77, %cst_48 {dimension_numbers = #tpu.dot_dimension_numbers<[1], [0], [0], [1], [0, 0, 1, 1], [], []>} : vector<16x128xf32>, vector<128x384xf32>, vector<16x384xf32> -> vector<16x384xf32>
    %90 = vector.broadcast %79 : vector<1x384xf32> to vector<16x384xf32>
    %91 = arith.addf %89, %90 : vector<16x384xf32>
    %cst_49 = arith.constant dense<0.000000e+00> : vector<16x384xf32>
    %92 = tpu.matmul %53, %78, %cst_49 {dimension_numbers = #tpu.dot_dimension_numbers<[1], [0], [0], [1], [0, 0, 1, 1], [], []>} : vector<16x128xf32>, vector<128x384xf32>, vector<16x384xf32> -> vector<16x384xf32>
    %93 = vector.broadcast %80 : vector<1x384xf32> to vector<16x384xf32>
    %94 = arith.addf %92, %93 : vector<16x384xf32>
    %95 = vector.extract_strided_slice %91 {offsets = [0, 0], sizes = [16, 128], strides = [1, 1]} : vector<16x384xf32> to vector<16x128xf32>
    %96 = vector.extract_strided_slice %94 {offsets = [0, 0], sizes = [16, 128], strides = [1, 1]} : vector<16x384xf32> to vector<16x128xf32>
    %97 = arith.addf %95, %96 : vector<16x128xf32>
    %98 = arith.negf %97 : vector<16x128xf32>
    %99 = math.exp %98 : vector<16x128xf32>
    %cst_50 = arith.constant 1.000000e+00 : f32
    %100 = vector.broadcast %cst_50 : f32 to vector<16x128xf32>
    %101 = arith.addf %100, %99 : vector<16x128xf32>
    %102 = arith.divf %100, %101 : vector<16x128xf32>
    %103 = vector.extract_strided_slice %91 {offsets = [0, 128], sizes = [16, 128], strides = [1, 1]} : vector<16x384xf32> to vector<16x128xf32>
    %104 = vector.extract_strided_slice %94 {offsets = [0, 128], sizes = [16, 128], strides = [1, 1]} : vector<16x384xf32> to vector<16x128xf32>
    %105 = arith.addf %103, %104 : vector<16x128xf32>
    %106 = arith.negf %105 : vector<16x128xf32>
    %107 = math.exp %106 : vector<16x128xf32>
    %cst_51 = arith.constant 1.000000e+00 : f32
    %108 = vector.broadcast %cst_51 : f32 to vector<16x128xf32>
    %109 = arith.addf %108, %107 : vector<16x128xf32>
    %110 = arith.divf %108, %109 : vector<16x128xf32>
    %111 = vector.extract_strided_slice %91 {offsets = [0, 256], sizes = [16, 128], strides = [1, 1]} : vector<16x384xf32> to vector<16x128xf32>
    %112 = vector.extract_strided_slice %94 {offsets = [0, 256], sizes = [16, 128], strides = [1, 1]} : vector<16x384xf32> to vector<16x128xf32>
    %113 = arith.mulf %102, %112 : vector<16x128xf32>
    %114 = arith.addf %111, %113 : vector<16x128xf32>
    %115 = math.tanh %114 : vector<16x128xf32>
    %cst_52 = arith.constant 1.000000e+00 : f32
    %116 = vector.broadcast %cst_52 : f32 to vector<16x128xf32>
    %117 = arith.subf %116, %110 : vector<16x128xf32>
    %118 = arith.mulf %117, %115 : vector<16x128xf32>
    %119 = arith.mulf %110, %53 : vector<16x128xf32>
    %120 = arith.addf %118, %119 : vector<16x128xf32>
    %cst_53 = arith.constant dense<0.000000e+00> : vector<16x384xf32>
    %121 = tpu.matmul %120, %81, %cst_53 {dimension_numbers = #tpu.dot_dimension_numbers<[1], [0], [0], [1], [0, 0, 1, 1], [], []>} : vector<16x128xf32>, vector<128x384xf32>, vector<16x384xf32> -> vector<16x384xf32>
    %122 = vector.broadcast %82 : vector<1x384xf32> to vector<16x384xf32>
    %123 = arith.addf %121, %122 : vector<16x384xf32>
    %124 = arith.negf %123 : vector<16x384xf32>
    %125 = math.exp %124 : vector<16x384xf32>
    %cst_54 = arith.constant 1.000000e+00 : f32
    %126 = vector.broadcast %cst_54 : f32 to vector<16x384xf32>
    %127 = arith.addf %126, %125 : vector<16x384xf32>
    %128 = arith.divf %126, %127 : vector<16x384xf32>
    %129 = vector.extract_strided_slice %128 {offsets = [0, 0], sizes = [16, 128], strides = [1, 1]} : vector<16x384xf32> to vector<16x128xf32>
    %130 = vector.extract_strided_slice %128 {offsets = [0, 128], sizes = [16, 128], strides = [1, 1]} : vector<16x384xf32> to vector<16x128xf32>
    %131 = arith.mulf %74, %129 : vector<16x128xf32>
    %cst_55 = arith.constant dense<0.000000e+00> : vector<16x128xf32>
    %132 = tpu.matmul %1, %131, %cst_55 {dimension_numbers = #tpu.dot_dimension_numbers<[1], [0], [0], [1], [0, 0, 1, 1], [], []>} : vector<16x16xf32>, vector<16x128xf32>, vector<16x128xf32> -> vector<16x128xf32>
    %133 = arith.mulf %130, %132 : vector<16x128xf32>
    %cst_56 = arith.constant dense<0.000000e+00> : vector<16xf32>
    %134 = vector.multi_reduction <add>, %133, %cst_56 [1] : vector<16x128xf32> to vector<16xf32>
    %135 = vector.shape_cast %134 : vector<16xf32> to vector<16x1xf32>
    %136 = tpu.iota {dimensions = array<i32: 1>} : vector<16x128xi32>
    %c64_i32 = arith.constant 64 : i32
    %137 = vector.broadcast %c64_i32 : i32 to vector<16x128xi32>
    %138 = arith.cmpi eq, %136, %137 : vector<16x128xi32>
    %139 = vector.shape_cast %68 : vector<16x1xf32> to vector<16x1xf32>
    %140 = vector.broadcast %139 : vector<16x1xf32> to vector<16x128xf32>
    %141 = arith.select %138, %140, %120 : vector<16x128xi1>, vector<16x128xf32>
    %c65_i32 = arith.constant 65 : i32
    %142 = vector.broadcast %c65_i32 : i32 to vector<16x128xi32>
    %143 = arith.cmpi eq, %136, %142 : vector<16x128xi32>
    %144 = vector.shape_cast %135 : vector<16x1xf32> to vector<16x1xf32>
    %145 = vector.broadcast %144 : vector<16x1xf32> to vector<16x128xf32>
    %146 = arith.select %143, %145, %141 : vector<16x128xi1>, vector<16x128xf32>
    %c0_57 = arith.constant 0 : index
    %c0_58 = arith.constant 0 : index
    %c0_59 = arith.constant 0 : index
    %147 = vector.load %arg4[%c0_57, %c0_58, %c0_59] : memref<1x16x128xf32, #tpu.memory_space<vmem>>, vector<1x16x128xf32>
    %148 = vector.shape_cast %147 : vector<1x16x128xf32> to vector<16x128xf32>
    %149 = vector.shape_cast %146 : vector<16x128xf32> to vector<1x16x128xf32>
    tpu.vector_store %arg4[%c0_57, %c0_58, %c0_59], %149 {strides = array<i32>} : memref<1x16x128xf32, #tpu.memory_space<vmem>>, vector<1x16x128xf32>,
    return
  }
  func.func @transform_0(%arg0: i32) -> (i32, i32, i32) {
    %c0_i32 = arith.constant 0 : i32
    %c0_i32_0 = arith.constant 0 : i32
    %c0_i32_1 = arith.constant 0 : i32
    return %arg0, %c0_i32, %c0_i32_0 : i32, i32, i32
  }
  func.func @transform_1(%arg0: i32) -> (i32, i32) {
    %c0_i32 = arith.constant 0 : i32
    %c0_i32_0 = arith.constant 0 : i32
    %c0_i32_1 = arith.constant 0 : i32
    return %c0_i32, %c0_i32_0 : i32, i32
  }
  func.func @transform_2(%arg0: i32) -> (i32, i32) {
    %c0_i32 = arith.constant 0 : i32
    %c0_i32_0 = arith.constant 0 : i32
    %c0_i32_1 = arith.constant 0 : i32
    return %c0_i32, %c0_i32_0 : i32, i32
  }
  func.func @transform_3(%arg0: i32) -> (i32, i32, i32) {
    %c0_i32 = arith.constant 0 : i32
    %c0_i32_0 = arith.constant 0 : i32
    %c0_i32_1 = arith.constant 0 : i32
    return %arg0, %c0_i32, %c0_i32_0 : i32, i32, i32
  }
}

</mosaic_0001>

<llo_original>
// kernel: custom-call
$region0: #{custom-call}
  %s0 = inlined_call_operand.vmem [shape: f32[4,16], index: 0, kind: output, shape index: {}]

// kernel: tile.13
$region0: #{tile.13}
  #allocation0 [shape = 's32[1]{0}', space=sflag, size = 0x4, scoped, tag = 'scoped memory for tile.13']
  %s0 = inlined_call_operand.vmem [shape: f32[8], index: 0, kind: input, shape index: {}]
  %s1 = inlined_call_operand.vmem [shape: f32[6,8], index: 1, kind: output, shape index: {}]
  // Predicated region
  $region2: #{tile.13} parent=0 // pred_check
    _
  $region3: #{tile.13} parent=0 // pred_check_branch
    %3 = sbr.rel (0) target = $region5
  $region4: #{tile.13} parent=0 // pred_region
    _
  $region5: #{tile.13} parent=0 // pred_fallthru
    _
  %v4 = vld [vmem:[%s0] ss:$0 sm:$0xff]
  %5 = vst [vmem:[%s1] sm:$0xff] %v4

// kernel: tile.14
$region0: #{tile.14}
  %s0 = inlined_call_operand.vmem [shape: f32[6,8], index: 0, kind: input, shape index: {}]
  %s1 = inlined_call_operand.vmem [shape: f32[1,48], index: 1, kind: output, shape index: {}]
  $region1: #{tile.14} parent=0
    #allocation0 [shape = 'u8[4096]{0}', space=vmem, size = 0x1000, scoped, tag = 'scoped mem for output reshape']
    %v2 = vld [vmem:[%s0] sm:$0x1]
    %vm3 = vcmask 64512
    %4 = vst.msk [vmem:[#allocation0] sm:$0x1] %vm3, %v2
    %s5 = scalar_lea.vmem %s0, 5
    %v6 = vld [vmem:[%s5] sm:$0x1]
    %7 = vrot.lane.b32.xlu0 %v6, 40
    %v8 = vpop.permute.xlu0 %7
    %vm9 = vcmask 392512
    %10 = vst.msk [vmem:[#allocation0] sm:$0x1] %vm9, %v8
    %s11 = scalar_lea.vmem %s0, 4
    %v12 = vld [vmem:[%s11] sm:$0x1]
    %13 = vrot.lane.b32.xlu0 %v12, 32
    %v14 = vpop.permute.xlu0 %13
    %vm15 = vcmask 326912
    %16 = vst.msk [vmem:[#allocation0] sm:$0x1] %vm15, %v14
    %s17 = scalar_lea.vmem %s0, 3
    %v18 = vld [vmem:[%s17] sm:$0x1]
    %19 = vrot.lane.b32.xlu0 %v18, 24
    %v20 = vpop.permute.xlu0 %19
    %vm21 = vcmask 261312
    %22 = vst.msk [vmem:[#allocation0] sm:$0x1] %vm21, %v20
    %s23 = scalar_lea.vmem %s0, 2
    %v24 = vld [vmem:[%s23] sm:$0x1]
    %25 = vrot.lane.b32.xlu0 %v24, 16
    %v26 = vpop.permute.xlu0 %25
    %vm27 = vcmask 195712
    %28 = vst.msk [vmem:[#allocation0] sm:$0x1] %vm27, %v26
    %s29 = scalar_lea.vmem %s0, 1
    %v30 = vld [vmem:[%s29] sm:$0x1]
    %31 = vrot.lane.b32.xlu0 %v30, 8
    %v32 = vpop.permute.xlu0 %31
    %vm33 = vcmask 130112
    %34 = vst.msk [vmem:[#allocation0] sm:$0x1] %vm33, %v32
    %s36 = ssub.s32 2, 1
    %v37 = vld [vmem:[#allocation0] sm:%s36]
    %s39 = ssub.s32 2, 1
    %40 = vst [vmem:[%s1] sm:%s39] %v37

// kernel: pigwn_forward.1
$region0: #{pigwn_forward.1}
  #allocation0 [shape = 'u32[]', space=smem, size = 0x4, offset = 0x4, fixed_abs, tag = 'smem constant byte address 0x4 - core index']
  #allocation1 [shape = 'u32[72,128]{1,0:T(1,128)}', space=vmem, size = 0x9000, scoped, tag = 'internal scratch']
  %s0 = inlined_call_operand.vmem [shape: f32[2,320,128], index: 0, kind: input, shape index: {}]
  %s1 = inlined_call_operand.vmem [shape: f32[272,128], index: 1, kind: input, shape index: {}]
  %s2 = inlined_call_operand.vmem [shape: f32[816,384], index: 2, kind: input, shape index: {}]
  %s3 = inlined_call_operand.vmem [shape: f32[2,16,128], index: 3, kind: output, shape index: {}]
  %s4 = sld [smem:[#allocation0]]
  $region45: #{pigwn_forward.1} parent=0
    _
  %s6 = ssub.s32 1, %s4
  %s7 = scalar_select 0, %s6, %s4
  loop: start=0, step=1, limit=4
  $region2: #{pigwn_forward.1} parent=0 // loop_pre_header
    _
  $region3: #{pigwn_forward.1} parent=0 // loop_header
    %s9 = sphi 0, %s13
    %p10 = scmp.ge.s32.totalorder %s9, 4
    %s19 = sphi 0, %s21
    %s22 = sphi 0, %s19
    %s23 = sphi 0, %s22
    %s39 = sphi 0, %s23
    %s43 = sphi 0, %s43
    %s45 = sphi 0, %s43
    %s46 = sphi 0, %s45
    %s60 = sphi 0, %s46
    %s64 = sphi 0, %s64
    %s66 = sphi 0, %s64
    %s67 = sphi 0, %s66
    %s81 = sphi 0, %s67
    %s87 = sphi 0, %s89
    %s90 = sphi 0, %s87
    %s91 = sphi 0, %s90
    %s107 = sphi 0, %s91
  $region4: #{pigwn_forward.1} parent=0 // loop_header_branch
    %12 = sbr.rel (%p10) target = $region8
  $region5: #{pigwn_forward.1} parent=0 // loop_body
    %s14 = ssub.s32 %s9, 1
    %s15 = ssub.s32 %s9, 2
    %s16 = sadd.s32 %s9, 1
    %s17 = ssub.s32 %s9, %s16
    %p18 = scmp.eq.s32.totalorder %s17, 0
    %s20 = sadd.s32 %s19, 1
    %s21 = scalar_select %p18, %s19, %s20
    %p24 = pneg %p18
    %p25 = scmp.eq.s32.totalorder %s9, 1
    %p26 = por %p24, %p25
    %p27 = scmp.ne.s32.totalorder %s19, %s22
    %p28 = scmp.eq.s32.totalorder %s9, 0
    %p29 = por %p27, %p28
    %p30 = scmp.ne.s32.totalorder %s19, %s22
    %p31 = scmp.eq.s32.totalorder %s14, 1
    %p32 = por %p30, %p31
    %p33 = scmp.ne.s32.totalorder %s22, %s23
    %p34 = scmp.eq.s32.totalorder %s14, 0
    %p35 = por %p33, %p34
    %p36 = scmp.ne.s32.totalorder %s22, %s23
    %p37 = scmp.eq.s32.totalorder %s15, 1
    %p38 = por %p36, %p37
    %p40 = scmp.ne.s32.totalorder %s23, %s39
    %p41 = scmp.eq.s32.totalorder %s15, 0
    %p42 = por %p40, %p41
    %s44 = sadd.s32 %s43, 1
    %p47 = scmp.eq.s32.totalorder %s9, 1
    %p48 = scmp.ne.s32.totalorder %s43, %s45
    %p49 = scmp.eq.s32.totalorder %s9, 0
    %p50 = por %p48, %p49
    %p51 = scmp.ne.s32.totalorder %s43, %s45
    %p52 = scmp.eq.s32.totalorder %s14, 1
    %p53 = por %p51, %p52
    %p54 = scmp.ne.s32.totalorder %s45, %s46
    %p55 = scmp.eq.s32.totalorder %s14, 0
    %p56 = por %p54, %p55
    %p57 = scmp.ne.s32.totalorder %s45, %s46
    %p58 = scmp.eq.s32.totalorder %s15, 1
    %p59 = por %p57, %p58
    %p61 = scmp.ne.s32.totalorder %s46, %s60
    %p62 = scmp.eq.s32.totalorder %s15, 0
    %p63 = por %p61, %p62
    %s65 = sadd.s32 %s64, 1
    %p68 = scmp.eq.s32.totalorder %s9, 1
    %p69 = scmp.ne.s32.totalorder %s64, %s66
    %p70 = scmp.eq.s32.totalorder %s9, 0
    %p71 = por %p69, %p70
    %p72 = scmp.ne.s32.totalorder %s64, %s66
    %p73 = scmp.eq.s32.totalorder %s14, 1
    %p74 = por %p72, %p73
    %p75 = scmp.ne.s32.totalorder %s66, %s67
    %p76 = scmp.eq.s32.totalorder %s14, 0
    %p77 = por %p75, %p76
    %p78 = scmp.ne.s32.totalorder %s66, %s67
    %p79 = scmp.eq.s32.totalorder %s15, 1
    %p80 = por %p78, %p79
    %p82 = scmp.ne.s32.totalorder %s67, %s81
    %p83 = scmp.eq.s32.totalorder %s15, 0
    %p84 = por %p82, %p83
    %s85 = ssub.s32 %s9, %s16
    %p86 = scmp.eq.s32.totalorder %s85, 0
    %s88 = sadd.s32 %s87, 1
    %s89 = scalar_select %p86, %s87, %s88
    %p92 = pneg %p86
    %p93 = scmp.eq.s32.totalorder %s9, 1
    %p94 = por %p92, %p93
    %p95 = scmp.ne.s32.totalorder %s87, %s90
    %p96 = scmp.eq.s32.totalorder %s9, 0
    %p97 = por %p95, %p96
    %p98 = scmp.ne.s32.totalorder %s87, %s90
    %p99 = scmp.eq.s32.totalorder %s14, 1
    %p100 = por %p98, %p99
    %p101 = scmp.ne.s32.totalorder %s90, %s91
    %p102 = scmp.eq.s32.totalorder %s14, 0
    %p103 = por %p101, %p102
    %p104 = scmp.ne.s32.totalorder %s90, %s91
    %p105 = scmp.eq.s32.totalorder %s15, 1
    %p106 = por %p104, %p105
    %p108 = scmp.ne.s32.totalorder %s91, %s107
    %p109 = scmp.eq.s32.totalorder %s15, 0
    %p110 = por %p108, %p109
    %p111 = scmp.le.s32.totalorder 1, %s9
    %p112 = scmp.lt.s32.totalorder %s9, 3
    %p113 = pnand %p111, %p112
    %p114 = pneg %p113
    // Predicated region
    $region9: #{pigwn_forward.1} parent=5 // pred_check
      _
    $region10: #{pigwn_forward.1} parent=5 // pred_check_branch
      %116 = sbr.rel (%p113) target = $region12
    $region11: #{pigwn_forward.1} parent=5 // pred_region
      %s117 = ssub.s32 %s9, 1
      // Predicated region
      $region13: #{pigwn_forward.1} parent=11 // pred_check
        %p118 = pneg %p56
      $region14: #{pigwn_forward.1} parent=11 // pred_check_branch
        %120 = sbr.rel (%p118) target = $region16
      $region15: #{pigwn_forward.1} parent=11 // pred_region
        _
      $region16: #{pigwn_forward.1} parent=11 // pred_fallthru
        _
      // Predicated region
      $region17: #{pigwn_forward.1} parent=11 // pred_check
        %p121 = pneg %p77
      $region18: #{pigwn_forward.1} parent=11 // pred_check_branch
        %123 = sbr.rel (%p121) target = $region20
      $region19: #{pigwn_forward.1} parent=11 // pred_region
        _
      $region20: #{pigwn_forward.1} parent=11 // pred_fallthru
        _
    $region12: #{pigwn_forward.1} parent=5 // pred_fallthru
      _
    %p124 = scmp.lt.s32.totalorder %s9, 2
    // Predicated region
    $region21: #{pigwn_forward.1} parent=5 // pred_check
      %p125 = pneg %p124
    $region22: #{pigwn_forward.1} parent=5 // pred_check_branch
      %127 = sbr.rel (%p125) target = $region24
    $region23: #{pigwn_forward.1} parent=5 // pred_region
      // Predicated region
      $region25: #{pigwn_forward.1} parent=23 // pred_check
        %p128 = pneg %p29
      $region26: #{pigwn_forward.1} parent=23 // pred_check_branch
        %130 = sbr.rel (%p128) target = $region28
      $region27: #{pigwn_forward.1} parent=23 // pred_region
        %p131 = scmp.lt.s32.totalorder %s9, 1
        %s132 = scalar_select %p131, %s9, 1
        %s133 = smul.addr %s132, 40
        %s134 = smul.addr %s133, 8
        %s135 = scalar_lea.vmem %s0, %s134
      $region28: #{pigwn_forward.1} parent=23 // pred_fallthru
        _
    $region24: #{pigwn_forward.1} parent=5 // pred_fallthru
      _
    %p136 = scmp.le.s32.totalorder 1, %s9
    %p137 = scmp.lt.s32.totalorder %s9, 3
    %p138 = pnand %p136, %p137
    %p139 = pneg %p138
    // Predicated region
    $region29: #{pigwn_forward.1} parent=5 // pred_check
      _
    $region30: #{pigwn_forward.1} parent=5 // pred_check_branch
      %141 = sbr.rel (%p138) target = $region32
    $region31: #{pigwn_forward.1} parent=5 // pred_region
      %s142 = ssub.s32 %s9, 1
      %p143 = scmp.lt.s32.totalorder %s14, 1
      %s144 = scalar_select %p143, %s14, 1
      %s145 = smul.addr %s144, 40
      %s146 = smul.addr %s145, 8
      %s147 = scalar_lea.vmem %s0, %s146
      %p148 = pneg %p35
      %p149 = pneg %p32
      %p150 = pneg %p56
      %p151 = pneg %p53
      %p152 = pneg %p77
      %p153 = pneg %p74
      %p154 = pneg %p103
      %p155 = pneg %p100
      %p156 = scmp.lt.s32.totalorder %s14, 1
      %s157 = scalar_select %p156, %s14, 1
      %s158 = smul.addr %s157, 2
      %s159 = smul.addr %s158, 8
      %s160 = scalar_lea.vmem %s3, %s159
      %p161 = scmp.lt.s32.totalorder %s14, 1
      %s162 = scalar_select %p161, %s14, 1
      %s163 = smul.addr %s162, 40
      %s164 = smul.addr %s163, 8
      %s165 = scalar_lea.vmem %s0, %s164
      %p166 = scmp.lt.s32.totalorder %s14, 1
      %s167 = scalar_select %p166, %s14, 1
      %s168 = smul.addr %s167, 2
      %s169 = smul.addr %s168, 8
      %s170 = scalar_lea.vmem %s3, %s169
      %v171 = vld [vmem:[%s165] sm:$0xff]
      %v172 = vld [vmem:[%s165 + $0x8] sm:$0xff]
      %v173 = vld [vmem:[%s165 + $0x10] sm:$0xff]
      %v174 = vld [vmem:[%s165 + $0x18] sm:$0xff]
      %v175 = vld [vmem:[%s165 + $0x20] sm:$0xff]
      %v176 = vld [vmem:[%s165 + $0x28] sm:$0xff]
      %v177 = vld [vmem:[%s165 + $0x30] sm:$0xff]
      %v178 = vld [vmem:[%s165 + $0x38] sm:$0xff]
      %v179 = vld [vmem:[%s165 + $0x40] sm:$0xff]
      %v180 = vld [vmem:[%s165 + $0x48] sm:$0xff]
      %v181 = vld [vmem:[%s165 + $0x50] sm:$0xff]
      %v182 = vld [vmem:[%s165 + $0x58] sm:$0xff]
      %v183 = vld [vmem:[%s165 + $0x60] sm:$0xff]
      %v184 = vld [vmem:[%s165 + $0x68] sm:$0xff]
      %v185 = vld [vmem:[%s165 + $0x70] sm:$0xff]
      %v186 = vld [vmem:[%s165 + $0x78] sm:$0xff]
      %v187 = vld [vmem:[%s165 + $0x80] sm:$0xff]
      %v188 = vld [vmem:[%s165 + $0x88] sm:$0xff]
      %v189 = vld [vmem:[%s165 + $0x90] sm:$0xff]
      %v190 = vld [vmem:[%s165 + $0x98] sm:$0xff]
      %v191 = vld [vmem:[%s1] sm:$0xff]
      %v192 = vld [vmem:[%s1 + $0x8] sm:$0xff]
      %v193 = vld [vmem:[%s1 + $0x10] sm:$0xff]
      %v194 = vld [vmem:[%s1 + $0x18] sm:$0xff]
      %v195 = vld [vmem:[%s1 + $0x20] sm:$0xff]
      %v196 = vld [vmem:[%s1 + $0x28] sm:$0xff]
      %v197 = vld [vmem:[%s1 + $0x30] sm:$0xff]
      %v198 = vld [vmem:[%s1 + $0x38] sm:$0xff]
      %v199 = vld [vmem:[%s1 + $0x40] sm:$0xff]
      %v200 = vld [vmem:[%s1 + $0x48] sm:$0xff]
      %v201 = vld [vmem:[%s1 + $0x50] sm:$0xff]
      %v202 = vld [vmem:[%s1 + $0x58] sm:$0xff]
      %v203 = vld [vmem:[%s1 + $0x60] sm:$0xff]
      %v204 = vld [vmem:[%s1 + $0x68] sm:$0xff]
      %v205 = vld [vmem:[%s1 + $0x70] sm:$0xff]
      %v206 = vld [vmem:[%s1 + $0x78] sm:$0xff]
      %v207 = vld [vmem:[%s1 + $0x80] sm:$0x1]
      %v208 = vld [vmem:[%s2] sm:$0xff]
      %v209 = vld [vmem:[%s2 + $0x8] sm:$0xff]
      %v210 = vld [vmem:[%s2 + $0x10] sm:$0xff]
      %v211 = vld [vmem:[%s2 + $0x18] sm:$0xff]
      %v212 = vld [vmem:[%s2 + $0x20] sm:$0xff]
      %v213 = vld [vmem:[%s2 + $0x28] sm:$0xff]
      %v214 = vld [vmem:[%s2 + $0x30] sm:$0xff]
      %v215 = vld [vmem:[%s2 + $0x38] sm:$0xff]
      %v216 = vld [vmem:[%s2 + $0x40] sm:$0xff]
      %v217 = vld [vmem:[%s2 + $0x48] sm:$0xff]
      %v218 = vld [vmem:[%s2 + $0x50] sm:$0xff]
      %v219 = vld [vmem:[%s2 + $0x58] sm:$0xff]
      %v220 = vld [vmem:[%s2 + $0x60] sm:$0xff]
      %v221 = vld [vmem:[%s2 + $0x68] sm:$0xff]
      %v222 = vld [vmem:[%s2 + $0x70] sm:$0xff]
      %v223 = vld [vmem:[%s2 + $0x78] sm:$0xff]
      %v224 = vld [vmem:[%s2 + $0x80] sm:$0xff]
      %v225 = vld [vmem:[%s2 + $0x88] sm:$0xff]
      %v226 = vld [vmem:[%s2 + $0x90] sm:$0xff]
      %v227 = vld [vmem:[%s2 + $0x98] sm:$0xff]
      %v228 = vld [vmem:[%s2 + $0xa0] sm:$0xff]
      %v229 = vld [vmem:[%s2 + $0xa8] sm:$0xff]
      %v230 = vld [vmem:[%s2 + $0xb0] sm:$0xff]
      %v231 = vld [vmem:[%s2 + $0xb8] sm:$0xff]
      %v232 = vld [vmem:[%s2 + $0xc0] sm:$0xff]
      %v233 = vld [vmem:[%s2 + $0xc8] sm:$0xff]
      %v234 = vld [vmem:[%s2 + $0xd0] sm:$0xff]
      %v235 = vld [vmem:[%s2 + $0xd8] sm:$0xff]
      %v236 = vld [vmem:[%s2 + $0xe0] sm:$0xff]
      %v237 = vld [vmem:[%s2 + $0xe8] sm:$0xff]
      %v238 = vld [vmem:[%s2 + $0xf0] sm:$0xff]
      %v239 = vld [vmem:[%s2 + $0xf8] sm:$0xff]
      %v240 = vld [vmem:[%s2 + $0x100] sm:$0xff]
      %v241 = vld [vmem:[%s2 + $0x108] sm:$0xff]
      %v242 = vld [vmem:[%s2 + $0x110] sm:$0xff]
      %v243 = vld [vmem:[%s2 + $0x118] sm:$0xff]
      %v244 = vld [vmem:[%s2 + $0x120] sm:$0xff]
      %v245 = vld [vmem:[%s2 + $0x128] sm:$0xff]
      %v246 = vld [vmem:[%s2 + $0x130] sm:$0xff]
      %v247 = vld [vmem:[%s2 + $0x138] sm:$0xff]
      %v248 = vld [vmem:[%s2 + $0x140] sm:$0xff]
      %v249 = vld [vmem:[%s2 + $0x148] sm:$0xff]
      %v250 = vld [vmem:[%s2 + $0x150] sm:$0xff]
      %v251 = vld [vmem:[%s2 + $0x158] sm:$0xff]
      %v252 = vld [vmem:[%s2 + $0x160] sm:$0xff]
      %v253 = vld [vmem:[%s2 + $0x168] sm:$0xff]
      %v254 = vld [vmem:[%s2 + $0x170] sm:$0xff]
      %v255 = vld [vmem:[%s2 + $0x178] sm:$0xff]
      %v256 = vld [vmem:[%s2 + $0x180] sm:$0xff]
      %v257 = vld [vmem:[%s2 + $0x188] sm:$0xff]
      %v258 = vld [vmem:[%s2 + $0x190] sm:$0xff]
      %v259 = vld [vmem:[%s2 + $0x198] sm:$0xff]
      %v260 = vld [vmem:[%s2 + $0x1a0] sm:$0xff]
      %v261 = vld [vmem:[%s2 + $0x1a8] sm:$0xff]
      %v262 = vld [vmem:[%s2 + $0x1b0] sm:$0xff]
      %v263 = vld [vmem:[%s2 + $0x1b8] sm:$0xff]
      %v264 = vld [vmem:[%s2 + $0x1c0] sm:$0xff]
      %v265 = vld [vmem:[%s2 + $0x1c8] sm:$0xff]
      %v266 = vld [vmem:[%s2 + $0x1d0] sm:$0xff]
      %v267 = vld [vmem:[%s2 + $0x1d8] sm:$0xff]
      %v268 = vld [vmem:[%s2 + $0x1e0] sm:$0xff]
      %v269 = vld [vmem:[%s2 + $0x1e8] sm:$0xff]
      %v270 = vld [vmem:[%s2 + $0x1f0] sm:$0xff]
      %v271 = vld [vmem:[%s2 + $0x1f8] sm:$0xff]
      %v272 = vld [vmem:[%s2 + $0x200] sm:$0xff]
      %v273 = vld [vmem:[%s2 + $0x208] sm:$0xff]
      %v274 = vld [vmem:[%s2 + $0x210] sm:$0xff]
      %v275 = vld [vmem:[%s2 + $0x218] sm:$0xff]
      %v276 = vld [vmem:[%s2 + $0x220] sm:$0xff]
      %v277 = vld [vmem:[%s2 + $0x228] sm:$0xff]
      %v278 = vld [vmem:[%s2 + $0x230] sm:$0xff]
      %v279 = vld [vmem:[%s2 + $0x238] sm:$0xff]
      %v280 = vld [vmem:[%s2 + $0x240] sm:$0xff]
      %v281 = vld [vmem:[%s2 + $0x248] sm:$0xff]
      %v282 = vld [vmem:[%s2 + $0x250] sm:$0xff]
      %v283 = vld [vmem:[%s2 + $0x258] sm:$0xff]
      %v284 = vld [vmem:[%s2 + $0x260] sm:$0xff]
      %v285 = vld [vmem:[%s2 + $0x268] sm:$0xff]
      %v286 = vld [vmem:[%s2 + $0x270] sm:$0xff]
      %v287 = vld [vmem:[%s2 + $0x278] sm:$0xff]
      %v288 = vld [vmem:[%s2 + $0x280] sm:$0xff]
      %v289 = vld [vmem:[%s2 + $0x288] sm:$0xff]
      %v290 = vld [vmem:[%s2 + $0x290] sm:$0xff]
      %v291 = vld [vmem:[%s2 + $0x298] sm:$0xff]
      %v292 = vld [vmem:[%s2 + $0x2a0] sm:$0xff]
      %v293 = vld [vmem:[%s2 + $0x2a8] sm:$0xff]
      %v294 = vld [vmem:[%s2 + $0x2b0] sm:$0xff]
      %v295 = vld [vmem:[%s2 + $0x2b8] sm:$0xff]
      %v296 = vld [vmem:[%s2 + $0x2c0] sm:$0xff]
      %v297 = vld [vmem:[%s2 + $0x2c8] sm:$0xff]
      %v298 = vld [vmem:[%s2 + $0x2d0] sm:$0xff]
      %v299 = vld [vmem:[%s2 + $0x2d8] sm:$0xff]
      %v300 = vld [vmem:[%s2 + $0x2e0] sm:$0xff]
      %v301 = vld [vmem:[%s2 + $0x2e8] sm:$0xff]
      %v302 = vld [vmem:[%s2 + $0x2f0] sm:$0xff]
      %v303 = vld [vmem:[%s2 + $0x2f8] sm:$0xff]
      %s304 = scalar_lea.vmem %s2, 768
      %v305 = vld [vmem:[%s304] ss:$8 sm:$0x7]
      %s306 = scalar_lea.vmem %s2, 792
      %v307 = vld [vmem:[%s306] ss:$8 sm:$0x7]
      %v308 = vld [vmem:[%s2 + $0x330] sm:$0xff]
      %v309 = vld [vmem:[%s2 + $0x338] sm:$0xff]
      %v310 = vld [vmem:[%s2 + $0x348] sm:$0xff]
      %v311 = vld [vmem:[%s2 + $0x350] sm:$0xff]
      %v312 = vld [vmem:[%s2 + $0x360] sm:$0xff]
      %v313 = vld [vmem:[%s2 + $0x368] sm:$0xff]
      %v314 = vld [vmem:[%s2 + $0x378] sm:$0xff]
      %v315 = vld [vmem:[%s2 + $0x380] sm:$0xff]
      %v316 = vld [vmem:[%s2 + $0x390] sm:$0xff]
      %v317 = vld [vmem:[%s2 + $0x398] sm:$0xff]
      %v318 = vld [vmem:[%s2 + $0x3a8] sm:$0xff]
      %v319 = vld [vmem:[%s2 + $0x3b0] sm:$0xff]
      %v320 = vld [vmem:[%s2 + $0x3c0] sm:$0xff]
      %v321 = vld [vmem:[%s2 + $0x3c8] sm:$0xff]
      %v322 = vld [vmem:[%s2 + $0x3d8] sm:$0xff]
      %v323 = vld [vmem:[%s2 + $0x3e0] sm:$0xff]
      %v324 = vld [vmem:[%s2 + $0x3f0] sm:$0xff]
      %v325 = vld [vmem:[%s2 + $0x3f8] sm:$0xff]
      %v326 = vld [vmem:[%s2 + $0x408] sm:$0xff]
      %v327 = vld [vmem:[%s2 + $0x410] sm:$0xff]
      %v328 = vld [vmem:[%s2 + $0x420] sm:$0xff]
      %v329 = vld [vmem:[%s2 + $0x428] sm:$0xff]
      %v330 = vld [vmem:[%s2 + $0x438] sm:$0xff]
      %v331 = vld [vmem:[%s2 + $0x440] sm:$0xff]
      %v332 = vld [vmem:[%s2 + $0x450] sm:$0xff]
      %v333 = vld [vmem:[%s2 + $0x458] sm:$0xff]
      %v334 = vld [vmem:[%s2 + $0x468] sm:$0xff]
      %v335 = vld [vmem:[%s2 + $0x470] sm:$0xff]
      %v336 = vld [vmem:[%s2 + $0x480] sm:$0xff]
      %v337 = vld [vmem:[%s2 + $0x488] sm:$0xff]
      %v338 = vld [vmem:[%s2 + $0x498] sm:$0xff]
      %v339 = vld [vmem:[%s2 + $0x4a0] sm:$0xff]
      %s340 = scalar_lea.vmem %s2, 1200
      %v341 = vld [vmem:[%s340] ss:$8 sm:$0x7]
      %342 = vmatpush.msra.mxu0 %v206
      %343 = vmatpush.msra.mxu0 %v205
      %344 = vmatpush.msra.mxu0 %v204
      %345 = vmatpush.msra.mxu0 %v203
      %346 = vmatpush.msra.mxu0 %v202
      %347 = vmatpush.msra.mxu0 %v201
      %348 = vmatpush.msra.mxu0 %v200
      %349 = vmatpush.msra.mxu0 %v199
      %350 = vmatpush.msra.mxu0 %v198
      %351 = vmatpush.msra.mxu0 %v197
      %352 = vmatpush.msra.mxu0 %v196
      %353 = vmatpush.msra.mxu0 %v195
      %354 = vmatpush.msra.mxu0 %v194
      %355 = vmatpush.msra.mxu0 %v193
      %356 = vmatpush.msra.mxu0 %v192
      %357 = vmatpush.msra.mxu0 %v191
      %358 = vmatmul.f32.gmra.mxu0 %v173
      %v359 = vpop.f32.mrf.mxu0
      %v360 = vadd.f32 0.0, %v359
      %361 = vmatmul.f32.gmra.mxu0 %v174
      %v362 = vpop.f32.mrf.mxu0
      %v363 = vadd.f32 0.0, %v362
      %364 = vmatmul.f32.gmra.mxu0 %v175
      %v365 = vpop.f32.mrf.mxu0
      %v366 = vadd.f32 0.0, %v365
      %367 = vmatmul.f32.gmra.mxu0 %v176
      %v368 = vpop.f32.mrf.mxu0
      %v369 = vadd.f32 0.0, %v368
      %370 = vmatmul.f32.gmra.mxu0 %v177
      %v371 = vpop.f32.mrf.mxu0
      %v372 = vadd.f32 0.0, %v371
      %373 = vmatmul.f32.gmra.mxu0 %v178
      %v374 = vpop.f32.mrf.mxu0
      %v375 = vadd.f32 0.0, %v374
      %376 = vmatmul.f32.gmra.mxu0 %v179
      %v377 = vpop.f32.mrf.mxu0
      %v378 = vadd.f32 0.0, %v377
      %379 = vmatmul.f32.gmra.mxu0 %v180
      %v380 = vpop.f32.mrf.mxu0
      %v381 = vadd.f32 0.0, %v380
      %382 = vmatmul.f32.gmra.mxu0 %v181
      %v383 = vpop.f32.mrf.mxu0
      %v384 = vadd.f32 0.0, %v383
      %385 = vmatmul.f32.gmra.mxu0 %v182
      %v386 = vpop.f32.mrf.mxu0
      %v387 = vadd.f32 0.0, %v386
      %388 = vmatmul.f32.gmra.mxu0 %v183
      %v389 = vpop.f32.mrf.mxu0
      %v390 = vadd.f32 0.0, %v389
      %391 = vmatmul.f32.gmra.mxu0 %v184
      %v392 = vpop.f32.mrf.mxu0
      %v393 = vadd.f32 0.0, %v392
      %394 = vmatmul.f32.gmra.mxu0 %v185
      %v395 = vpop.f32.mrf.mxu0
      %v396 = vadd.f32 0.0, %v395
      %397 = vmatmul.f32.gmra.mxu0 %v186
      %v398 = vpop.f32.mrf.mxu0
      %v399 = vadd.f32 0.0, %v398
      %400 = vmatmul.f32.gmra.mxu0 %v187
      %v401 = vpop.f32.mrf.mxu0
      %v402 = vadd.f32 0.0, %v401
      %403 = vmatmul.f32.gmra.mxu0 %v188
      %v404 = vpop.f32.mrf.mxu0
      %v405 = vadd.f32 0.0, %v404
      %406 = vdwg.mxu0
      %v407 = vperm.slane %v207, 0
      %408 = vmatpush.msra.mxu0 %v405
      %409 = vmatpush.msra.mxu0 %v402
      %410 = vmatpush.msra.mxu0 %v399
      %411 = vmatpush.msra.mxu0 %v396
      %412 = vmatpush.msra.mxu0 %v393
      %413 = vmatpush.msra.mxu0 %v390
      %414 = vmatpush.msra.mxu0 %v387
      %415 = vmatpush.msra.mxu0 %v384
      %416 = vmatpush.msra.mxu0 %v381
      %417 = vmatpush.msra.mxu0 %v378
      %418 = vmatpush.msra.mxu0 %v375
      %419 = vmatpush.msra.mxu0 %v372
      %420 = vmatpush.msra.mxu0 %v369
      %421 = vmatpush.msra.mxu0 %v366
      %422 = vmatpush.msra.mxu0 %v363
      %423 = vmatpush.msra.mxu0 %v360
      %424 = vmatmul.f32.gmra.mxu0 %v171
      %v425 = vpop.f32.mrf.mxu0
      %v426 = vadd.f32 %v407, %v425
      %427 = vmatmul.f32.gmra.mxu0 %v172
      %v428 = vpop.f32.mrf.mxu0
      %v429 = vadd.f32 %v407, %v428
      %430 = vdwg.mxu0
      %v431 = vmax.f32 %v426, 0.0
      %v432 = vmax.f32 %v429, 0.0
      %v434 = vperm.slane %v305, 0
      %v435 = vperm.slane %v305, 1
      %v436 = vperm.slane %v305, 2
      %440 = vmatpush.msra.mxu0 %v253
      %441 = vmatpush.msra.mxu0 %v250
      %442 = vmatpush.msra.mxu0 %v247
      %443 = vmatpush.msra.mxu0 %v244
      %444 = vmatpush.msra.mxu0 %v241
      %445 = vmatpush.msra.mxu0 %v238
      %446 = vmatpush.msra.mxu0 %v235
      %447 = vmatpush.msra.mxu0 %v232
      %448 = vmatpush.msra.mxu0 %v229
      %449 = vmatpush.msra.mxu0 %v226
      %450 = vmatpush.msra.mxu0 %v223
      %451 = vmatpush.msra.mxu0 %v220
      %452 = vmatpush.msra.mxu0 %v217
      %453 = vmatpush.msra.mxu0 %v214
      %454 = vmatpush.msra.mxu0 %v211
      %455 = vmatpush.msra.mxu0 %v208
      %456 = vmatmul.f32.gmra.mxu0 %v431
      %v457 = vpop.f32.mrf.mxu0
      %v458 = vadd.f32 %v434, %v457
      %459 = vmatmul.f32.gmra.mxu0 %v432
      %v460 = vpop.f32.mrf.mxu0
      %v461 = vadd.f32 %v434, %v460
      %462 = vdwg.mxu0
      %463 = vmatpush.msra.mxu0 %v254
      %464 = vmatpush.msra.mxu0 %v251
      %465 = vmatpush.msra.mxu0 %v248
      %466 = vmatpush.msra.mxu0 %v245
      %467 = vmatpush.msra.mxu0 %v242
      %468 = vmatpush.msra.mxu0 %v239
      %469 = vmatpush.msra.mxu0 %v236
      %470 = vmatpush.msra.mxu0 %v233
      %471 = vmatpush.msra.mxu0 %v230
      %472 = vmatpush.msra.mxu0 %v227
      %473 = vmatpush.msra.mxu0 %v224
      %474 = vmatpush.msra.mxu0 %v221
      %475 = vmatpush.msra.mxu0 %v218
      %476 = vmatpush.msra.mxu0 %v215
      %477 = vmatpush.msra.mxu0 %v212
      %478 = vmatpush.msra.mxu0 %v209
      %479 = vmatmul.f32.gmra.mxu0 %v431
      %v480 = vpop.f32.mrf.mxu0
      %v481 = vadd.f32 %v435, %v480
      %482 = vmatmul.f32.gmra.mxu0 %v432
      %v483 = vpop.f32.mrf.mxu0
      %v484 = vadd.f32 %v435, %v483
      %485 = vdwg.mxu0
      %486 = vmatpush.msra.mxu0 %v255
      %487 = vmatpush.msra.mxu0 %v252
      %488 = vmatpush.msra.mxu0 %v249
      %489 = vmatpush.msra.mxu0 %v246
      %490 = vmatpush.msra.mxu0 %v243
      %491 = vmatpush.msra.mxu0 %v240
      %492 = vmatpush.msra.mxu0 %v237
      %493 = vmatpush.msra.mxu0 %v234
      %494 = vmatpush.msra.mxu0 %v231
      %495 = vmatpush.msra.mxu0 %v228
      %496 = vmatpush.msra.mxu0 %v225
      %497 = vmatpush.msra.mxu0 %v222
      %498 = vmatpush.msra.mxu0 %v219
      %499 = vmatpush.msra.mxu0 %v216
      %500 = vmatpush.msra.mxu0 %v213
      %501 = vmatpush.msra.mxu0 %v210
      %502 = vmatmul.f32.gmra.mxu0 %v431
      %v503 = vpop.f32.mrf.mxu0
      %v504 = vadd.f32 %v436, %v503
      %505 = vmatmul.f32.gmra.mxu0 %v432
      %v506 = vpop.f32.mrf.mxu0
      %v507 = vadd.f32 %v436, %v506
      %508 = vdwg.mxu0
      %v510 = vperm.slane %v307, 0
      %v511 = vperm.slane %v307, 1
      %v512 = vperm.slane %v307, 2
      %516 = vmatpush.msra.mxu0 %v301
      %517 = vmatpush.msra.mxu0 %v298
      %518 = vmatpush.msra.mxu0 %v295
      %519 = vmatpush.msra.mxu0 %v292
      %520 = vmatpush.msra.mxu0 %v289
      %521 = vmatpush.msra.mxu0 %v286
      %522 = vmatpush.msra.mxu0 %v283
      %523 = vmatpush.msra.mxu0 %v280
      %524 = vmatpush.msra.mxu0 %v277
      %525 = vmatpush.msra.mxu0 %v274
      %526 = vmatpush.msra.mxu0 %v271
      %527 = vmatpush.msra.mxu0 %v268
      %528 = vmatpush.msra.mxu0 %v265
      %529 = vmatpush.msra.mxu0 %v262
      %530 = vmatpush.msra.mxu0 %v259
      %531 = vmatpush.msra.mxu0 %v256
      %532 = vmatmul.f32.gmra.mxu0 0.0
      %v533 = vpop.f32.mrf.mxu0
      %v534 = vadd.f32 %v510, %v533
      %535 = vmatmul.f32.gmra.mxu0 0.0
      %v536 = vpop.f32.mrf.mxu0
      %v537 = vadd.f32 %v510, %v536
      %538 = vdwg.mxu0
      %539 = vmatpush.msra.mxu0 %v302
      %540 = vmatpush.msra.mxu0 %v299
      %541 = vmatpush.msra.mxu0 %v296
      %542 = vmatpush.msra.mxu0 %v293
      %543 = vmatpush.msra.mxu0 %v290
      %544 = vmatpush.msra.mxu0 %v287
      %545 = vmatpush.msra.mxu0 %v284
      %546 = vmatpush.msra.mxu0 %v281
      %547 = vmatpush.msra.mxu0 %v278
      %548 = vmatpush.msra.mxu0 %v275
      %549 = vmatpush.msra.mxu0 %v272
      %550 = vmatpush.msra.mxu0 %v269
      %551 = vmatpush.msra.mxu0 %v266
      %552 = vmatpush.msra.mxu0 %v263
      %553 = vmatpush.msra.mxu0 %v260
      %554 = vmatpush.msra.mxu0 %v257
      %555 = vmatmul.f32.gmra.mxu0 0.0
      %v556 = vpop.f32.mrf.mxu0
      %v557 = vadd.f32 %v511, %v556
      %558 = vmatmul.f32.gmra.mxu0 0.0
      %v559 = vpop.f32.mrf.mxu0
      %v560 = vadd.f32 %v511, %v559
      %561 = vdwg.mxu0
      %562 = vmatpush.msra.mxu0 %v303
      %563 = vmatpush.msra.mxu0 %v300
      %564 = vmatpush.msra.mxu0 %v297
      %565 = vmatpush.msra.mxu0 %v294
      %566 = vmatpush.msra.mxu0 %v291
      %567 = vmatpush.msra.mxu0 %v288
      %568 = vmatpush.msra.mxu0 %v285
      %569 = vmatpush.msra.mxu0 %v282
      %570 = vmatpush.msra.mxu0 %v279
      %571 = vmatpush.msra.mxu0 %v276
      %572 = vmatpush.msra.mxu0 %v273
      %573 = vmatpush.msra.mxu0 %v270
      %574 = vmatpush.msra.mxu0 %v267
      %575 = vmatpush.msra.mxu0 %v264
      %576 = vmatpush.msra.mxu0 %v261
      %577 = vmatpush.msra.mxu0 %v258
      %578 = vmatmul.f32.gmra.mxu0 0.0
      %v579 = vpop.f32.mrf.mxu0
      %v580 = vadd.f32 %v512, %v579
      %581 = vmatmul.f32.gmra.mxu0 0.0
      %v582 = vpop.f32.mrf.mxu0
      %v583 = vadd.f32 %v512, %v582
      %584 = vdwg.mxu0
      %v585 = vadd.f32 %v458, %v534
      %v586 = vadd.f32 %v461, %v537
      %v587 = vxor.u32 %v585, 2147483648
      %v588 = vxor.u32 %v586, 2147483648
      %v589 = vmul.f32 %v587, 1.442695
      %v590 = vpow.pop %v589
      %v591 = vmul.f32 %v588, 1.442695
      %v592 = vpow.pop %v591
      %v593 = vadd.f32 %v590, 1.0
      %v594 = vadd.f32 %v592, 1.0
      %v595 = vrcp.pop %v593
      %v596 = vmul.f32 %v593, %v595
      %v597 = vsub.f32 1.0, %v596
      %v598 = vmul.f32 %v595, %v597
      %v599 = vadd.f32 %v595, %v598
      %vm600 = vweird.f32 %v593
      %vm601 = vweird.f32 %v595
      %vm602 = vmor %vm600, %vm601
      %v603 = vsel %vm602, %v595, %v599
      %v604 = vand.u32 2147483647, %v593
      %vm605 = vcmp.eq.f32.partialorder %v604, 8.507059e+37
      %v606 = vand.u32 %v593, 2147483648
      %v607 = vor.u32 1.1754944e-38, %v606
      %v608 = vsel %vm605, %v607, %v603
      %v609 = vmul.f32 1.0, %v608
      %v610 = vrcp.pop %v594
      %v611 = vmul.f32 %v594, %v610
      %v612 = vsub.f32 1.0, %v611
      %v613 = vmul.f32 %v610, %v612
      %v614 = vadd.f32 %v610, %v613
      %vm615 = vweird.f32 %v594
      %vm616 = vweird.f32 %v610
      %vm617 = vmor %vm615, %vm616
      %v618 = vsel %vm617, %v610, %v614
      %v619 = vand.u32 2147483647, %v594
      %vm620 = vcmp.eq.f32.partialorder %v619, 8.507059e+37
      %v621 = vand.u32 %v594, 2147483648
      %v622 = vor.u32 1.1754944e-38, %v621
      %v623 = vsel %vm620, %v622, %v618
      %v624 = vmul.f32 1.0, %v623
      %v625 = vadd.f32 %v481, %v557
      %v626 = vadd.f32 %v484, %v560
      %v627 = vxor.u32 %v625, 2147483648
      %v628 = vxor.u32 %v626, 2147483648
      %v629 = vmul.f32 %v627, 1.442695
      %v630 = vpow.pop %v629
      %v631 = vmul.f32 %v628, 1.442695
      %v632 = vpow.pop %v631
      %v633 = vadd.f32 %v630, 1.0
      %v634 = vadd.f32 %v632, 1.0
      %v635 = vrcp.pop %v633
      %v636 = vmul.f32 %v633, %v635
      %v637 = vsub.f32 1.0, %v636
      %v638 = vmul.f32 %v635, %v637
      %v639 = vadd.f32 %v635, %v638
      %vm640 = vweird.f32 %v633
      %vm641 = vweird.f32 %v635
      %vm642 = vmor %vm640, %vm641
      %v643 = vsel %vm642, %v635, %v639
      %v644 = vand.u32 2147483647, %v633
      %vm645 = vcmp.eq.f32.partialorder %v644, 8.507059e+37
      %v646 = vand.u32 %v633, 2147483648
      %v647 = vor.u32 1.1754944e-38, %v646
      %v648 = vsel %vm645, %v647, %v643
      %v649 = vmul.f32 1.0, %v648
      %v650 = vrcp.pop %v634
      %v651 = vmul.f32 %v634, %v650
      %v652 = vsub.f32 1.0, %v651
      %v653 = vmul.f32 %v650, %v652
      %v654 = vadd.f32 %v650, %v653
      %vm655 = vweird.f32 %v634
      %vm656 = vweird.f32 %v650
      %vm657 = vmor %vm655, %vm656
      %v658 = vsel %vm657, %v650, %v654
      %v659 = vand.u32 2147483647, %v634
      %vm660 = vcmp.eq.f32.partialorder %v659, 8.507059e+37
      %v661 = vand.u32 %v634, 2147483648
      %v662 = vor.u32 1.1754944e-38, %v661
      %v663 = vsel %vm660, %v662, %v658
      %v664 = vmul.f32 1.0, %v663
      %v665 = vmul.f32 %v609, %v580
      %v666 = vmul.f32 %v624, %v583
      %v667 = vadd.f32 %v504, %v665
      %v668 = vadd.f32 %v507, %v666
      %v669 = vtanh.pop %v667
      %v670 = vtanh.pop %v668
      %v671 = vsub.f32 1.0, %v649
      %v672 = vsub.f32 1.0, %v664
      %v673 = vmul.f32 %v671, %v669
      %v674 = vmul.f32 %v672, %v670
      %v675 = vmul.f32 %v649, 0.0
      %v676 = vmul.f32 %v664, 0.0
      %v677 = vadd.f32 %v673, %v675
      %v678 = vadd.f32 %v674, %v676
      %v680 = vperm.slane %v341, 0
      %v681 = vperm.slane %v341, 1
      %684 = vmatpush.msra.mxu0 %v338
      %685 = vmatpush.msra.mxu0 %v336
      %686 = vmatpush.msra.mxu0 %v334
      %687 = vmatpush.msra.mxu0 %v332
      %688 = vmatpush.msra.mxu0 %v330
      %689 = vmatpush.msra.mxu0 %v328
      %690 = vmatpush.msra.mxu0 %v326
      %691 = vmatpush.msra.mxu0 %v324
      %692 = vmatpush.msra.mxu0 %v322
      %693 = vmatpush.msra.mxu0 %v320
      %694 = vmatpush.msra.mxu0 %v318
      %695 = vmatpush.msra.mxu0 %v316
      %696 = vmatpush.msra.mxu0 %v314
      %697 = vmatpush.msra.mxu0 %v312
      %698 = vmatpush.msra.mxu0 %v310
      %699 = vmatpush.msra.mxu0 %v308
      %700 = vmatmul.f32.gmra.mxu0 %v677
      %v701 = vpop.f32.mrf.mxu0
      %v702 = vadd.f32 %v680, %v701
      %703 = vmatmul.f32.gmra.mxu0 %v678
      %v704 = vpop.f32.mrf.mxu0
      %v705 = vadd.f32 %v680, %v704
      %706 = vdwg.mxu0
      %707 = vmatpush.msra.mxu0 %v339
      %708 = vmatpush.msra.mxu0 %v337
      %709 = vmatpush.msra.mxu0 %v335
      %710 = vmatpush.msra.mxu0 %v333
      %711 = vmatpush.msra.mxu0 %v331
      %712 = vmatpush.msra.mxu0 %v329
      %713 = vmatpush.msra.mxu0 %v327
      %714 = vmatpush.msra.mxu0 %v325
      %715 = vmatpush.msra.mxu0 %v323
      %716 = vmatpush.msra.mxu0 %v321
      %717 = vmatpush.msra.mxu0 %v319
      %718 = vmatpush.msra.mxu0 %v317
      %719 = vmatpush.msra.mxu0 %v315
      %720 = vmatpush.msra.mxu0 %v313
      %721 = vmatpush.msra.mxu0 %v311
      %722 = vmatpush.msra.mxu0 %v309
      %723 = vmatmul.f32.gmra.mxu0 %v677
      %v724 = vpop.f32.mrf.mxu0
      %v725 = vadd.f32 %v681, %v724
      %726 = vmatmul.f32.gmra.mxu0 %v678
      %v727 = vpop.f32.mrf.mxu0
      %v728 = vadd.f32 %v681, %v727
      %729 = vdwg.mxu0
      %v730 = vxor.u32 %v702, 2147483648
      %v731 = vxor.u32 %v725, 2147483648
      %v732 = vxor.u32 %v705, 2147483648
      %v733 = vxor.u32 %v728, 2147483648
      %v734 = vmul.f32 %v730, 1.442695
      %v735 = vpow.pop %v734
      %v736 = vmul.f32 %v731, 1.442695
      %v737 = vpow.pop %v736
      %v738 = vmul.f32 %v732, 1.442695
      %v739 = vpow.pop %v738
      %v740 = vmul.f32 %v733, 1.442695
      %v741 = vpow.pop %v740
      %v742 = vadd.f32 %v735, 1.0
      %v743 = vadd.f32 %v737, 1.0
      %v744 = vadd.f32 %v739, 1.0
      %v745 = vadd.f32 %v741, 1.0
      %v746 = vrcp.pop %v742
      %v747 = vmul.f32 %v742, %v746
      %v748 = vsub.f32 1.0, %v747
      %v749 = vmul.f32 %v746, %v748
      %v750 = vadd.f32 %v746, %v749
      %vm751 = vweird.f32 %v742
      %vm752 = vweird.f32 %v746
      %vm753 = vmor %vm751, %vm752
      %v754 = vsel %vm753, %v746, %v750
      %v755 = vand.u32 2147483647, %v742
      %vm756 = vcmp.eq.f32.partialorder %v755, 8.507059e+37
      %v757 = vand.u32 %v742, 2147483648
      %v758 = vor.u32 1.1754944e-38, %v757
      %v759 = vsel %vm756, %v758, %v754
      %v760 = vmul.f32 1.0, %v759
      %v761 = vrcp.pop %v743
      %v762 = vmul.f32 %v743, %v761
      %v763 = vsub.f32 1.0, %v762
      %v764 = vmul.f32 %v761, %v763
      %v765 = vadd.f32 %v761, %v764
      %vm766 = vweird.f32 %v743
      %vm767 = vweird.f32 %v761
      %vm768 = vmor %vm766, %vm767
      %v769 = vsel %vm768, %v761, %v765
      %v770 = vand.u32 2147483647, %v743
      %vm771 = vcmp.eq.f32.partialorder %v770, 8.507059e+37
      %v772 = vand.u32 %v743, 2147483648
      %v773 = vor.u32 1.1754944e-38, %v772
      %v774 = vsel %vm771, %v773, %v769
      %v775 = vmul.f32 1.0, %v774
      %v776 = vrcp.pop %v744
      %v777 = vmul.f32 %v744, %v776
      %v778 = vsub.f32 1.0, %v777
      %v779 = vmul.f32 %v776, %v778
      %v780 = vadd.f32 %v776, %v779
      %vm781 = vweird.f32 %v744
      %vm782 = vweird.f32 %v776
      %vm783 = vmor %vm781, %vm782
      %v784 = vsel %vm783, %v776, %v780
      %v785 = vand.u32 2147483647, %v744
      %vm786 = vcmp.eq.f32.partialorder %v785, 8.507059e+37
      %v787 = vand.u32 %v744, 2147483648
      %v788 = vor.u32 1.1754944e-38, %v787
      %v789 = vsel %vm786, %v788, %v784
      %v790 = vmul.f32 1.0, %v789
      %v791 = vrcp.pop %v745
      %v792 = vmul.f32 %v745, %v791
      %v793 = vsub.f32 1.0, %v792
      %v794 = vmul.f32 %v791, %v793
      %v795 = vadd.f32 %v791, %v794
      %vm796 = vweird.f32 %v745
      %vm797 = vweird.f32 %v791
      %vm798 = vmor %vm796, %vm797
      %v799 = vsel %vm798, %v791, %v795
      %v800 = vand.u32 2147483647, %v745
      %vm801 = vcmp.eq.f32.partialorder %v800, 8.507059e+37
      %v802 = vand.u32 %v745, 2147483648
      %v803 = vor.u32 1.1754944e-38, %v802
      %v804 = vsel %vm801, %v803, %v799
      %v805 = vmul.f32 1.0, %v804
      %v806 = vmul.f32 %v189, %v760
      %v807 = vmul.f32 %v190, %v790
      %vm808 = vcmask 130048
      %v810 = vsel %vm808, 1.0, 0
      %812 = vmatpush.msra.mxu0 0.0
      %813 = vmatpush.msra.mxu0 0.0
      %814 = vmatpush.msra.mxu0 0.0
      %815 = vmatpush.msra.mxu0 0.0
      %816 = vmatpush.msra.mxu0 0.0
      %817 = vmatpush.msra.mxu0 0.0
      %818 = vmatpush.msra.mxu0 0.0
      %819 = vmatpush.msra.mxu0 0.0
      %820 = vmatpush.msra.mxu0 0.0
      %821 = vmatpush.msra.mxu0 0.0
      %822 = vmatpush.msra.mxu0 0.0
      %823 = vmatpush.msra.mxu0 0.0
      %824 = vmatpush.msra.mxu0 0.0
      %825 = vmatpush.msra.mxu0 0.0
      %826 = vmatpush.msra.mxu0 %v807
      %827 = vmatpush.msra.mxu0 %v806
      %828 = vmatmul.f32.gmra.mxu0 %v810
      %v829 = vpop.f32.mrf.mxu0
      %v830 = vadd.f32 0.0, %v829
      %831 = vmatmul.f32.gmra.mxu0 %v810
      %v832 = vpop.f32.mrf.mxu0
      %v833 = vadd.f32 0.0, %v832
      %834 = vdwg.mxu0
      %v835 = vmul.f32 %v775, %v830
      %v836 = vmul.f32 %v805, %v833
      %837 = vadd.xlane.f32.xlu0 %v835
      %v838 = vpop.xlane.xlu0 %837
      %839 = vadd.xlane.f32.xlu0 %v836
      %v840 = vpop.xlane.xlu0 %839
      %v841 = vld [vmem:[%s165 + $0xa0] sm:$0xff]
      %v842 = vld [vmem:[%s165 + $0xa8] sm:$0xff]
      %v843 = vld [vmem:[%s165 + $0xb0] sm:$0xff]
      %v844 = vld [vmem:[%s165 + $0xb8] sm:$0xff]
      %v845 = vld [vmem:[%s165 + $0xc0] sm:$0xff]
      %v846 = vld [vmem:[%s165 + $0xc8] sm:$0xff]
      %v847 = vld [vmem:[%s165 + $0xd0] sm:$0xff]
      %v848 = vld [vmem:[%s165 + $0xd8] sm:$0xff]
      %v849 = vld [vmem:[%s165 + $0xe0] sm:$0xff]
      %v850 = vld [vmem:[%s165 + $0xe8] sm:$0xff]
      %v851 = vld [vmem:[%s165 + $0xf0] sm:$0xff]
      %v852 = vld [vmem:[%s165 + $0xf8] sm:$0xff]
      %v853 = vld [vmem:[%s165 + $0x100] sm:$0xff]
      %v854 = vld [vmem:[%s165 + $0x108] sm:$0xff]
      %v855 = vld [vmem:[%s165 + $0x110] sm:$0xff]
      %v856 = vld [vmem:[%s165 + $0x118] sm:$0xff]
      %v857 = vld [vmem:[%s165 + $0x120] sm:$0xff]
      %v858 = vld [vmem:[%s165 + $0x128] sm:$0xff]
      %v859 = vld [vmem:[%s165 + $0x130] sm:$0xff]
      %v860 = vld [vmem:[%s165 + $0x138] sm:$0xff]
      %v861 = vld [vmem:[%s1 + $0x88] sm:$0xff]
      %v862 = vld [vmem:[%s1 + $0x90] sm:$0xff]
      %v863 = vld [vmem:[%s1 + $0x98] sm:$0xff]
      %v864 = vld [vmem:[%s1 + $0xa0] sm:$0xff]
      %v865 = vld [vmem:[%s1 + $0xa8] sm:$0xff]
      %v866 = vld [vmem:[%s1 + $0xb0] sm:$0xff]
      %v867 = vld [vmem:[%s1 + $0xb8] sm:$0xff]
      %v868 = vld [vmem:[%s1 + $0xc0] sm:$0xff]
      %v869 = vld [vmem:[%s1 + $0xc8] sm:$0xff]
      %v870 = vld [vmem:[%s1 + $0xd0] sm:$0xff]
      %v871 = vld [vmem:[%s1 + $0xd8] sm:$0xff]
      %v872 = vld [vmem:[%s1 + $0xe0] sm:$0xff]
      %v873 = vld [vmem:[%s1 + $0xe8] sm:$0xff]
      %v874 = vld [vmem:[%s1 + $0xf0] sm:$0xff]
      %v875 = vld [vmem:[%s1 + $0xf8] sm:$0xff]
      %v876 = vld [vmem:[%s1 + $0x100] sm:$0xff]
      %v877 = vld [vmem:[%s1 + $0x108] sm:$0x1]
      %v878 = vld [vmem:[%s2 + $0x4c8] sm:$0xff]
      %v879 = vld [vmem:[%s2 + $0x4d0] sm:$0xff]
      %v880 = vld [vmem:[%s2 + $0x4d8] sm:$0xff]
      %v881 = vld [vmem:[%s2 + $0x4e0] sm:$0xff]
      %v882 = vld [vmem:[%s2 + $0x4e8] sm:$0xff]
      %v883 = vld [vmem:[%s2 + $0x4f0] sm:$0xff]
      %v884 = vld [vmem:[%s2 + $0x4f8] sm:$0xff]
      %v885 = vld [vmem:[%s2 + $0x500] sm:$0xff]
      %v886 = vld [vmem:[%s2 + $0x508] sm:$0xff]
      %v887 = vld [vmem:[%s2 + $0x510] sm:$0xff]
      %v888 = vld [vmem:[%s2 + $0x518] sm:$0xff]
      %v889 = vld [vmem:[%s2 + $0x520] sm:$0xff]
      %v890 = vld [vmem:[%s2 + $0x528] sm:$0xff]
      %v891 = vld [vmem:[%s2 + $0x530] sm:$0xff]
      %v892 = vld [vmem:[%s2 + $0x538] sm:$0xff]
      %v893 = vld [vmem:[%s2 + $0x540] sm:$0xff]
      %v894 = vld [vmem:[%s2 + $0x548] sm:$0xff]
      %v895 = vld [vmem:[%s2 + $0x550] sm:$0xff]
      %v896 = vld [vmem:[%s2 + $0x558] sm:$0xff]
      %v897 = vld [vmem:[%s2 + $0x560] sm:$0xff]
      %v898 = vld [vmem:[%s2 + $0x568] sm:$0xff]
      %v899 = vld [vmem:[%s2 + $0x570] sm:$0xff]
      %v900 = vld [vmem:[%s2 + $0x578] sm:$0xff]
      %v901 = vld [vmem:[%s2 + $0x580] sm:$0xff]
      %v902 = vld [vmem:[%s2 + $0x588] sm:$0xff]
      %v903 = vld [vmem:[%s2 + $0x590] sm:$0xff]
      %v904 = vld [vmem:[%s2 + $0x598] sm:$0xff]
      %v905 = vld [vmem:[%s2 + $0x5a0] sm:$0xff]
      %v906 = vld [vmem:[%s2 + $0x5a8] sm:$0xff]
      %v907 = vld [vmem:[%s2 + $0x5b0] sm:$0xff]
      %v908 = vld [vmem:[%s2 + $0x5b8] sm:$0xff]
      %v909 = vld [vmem:[%s2 + $0x5c0] sm:$0xff]
      %v910 = vld [vmem:[%s2 + $0x5c8] sm:$0xff]
      %v911 = vld [vmem:[%s2 + $0x5d0] sm:$0xff]
      %v912 = vld [vmem:[%s2 + $0x5d8] sm:$0xff]
      %v913 = vld [vmem:[%s2 + $0x5e0] sm:$0xff]
      %v914 = vld [vmem:[%s2 + $0x5e8] sm:$0xff]
      %v915 = vld [vmem:[%s2 + $0x5f0] sm:$0xff]
      %v916 = vld [vmem:[%s2 + $0x5f8] sm:$0xff]
      %v917 = vld [vmem:[%s2 + $0x600] sm:$0xff]
      %v918 = vld [vmem:[%s2 + $0x608] sm:$0xff]
      %v919 = vld [vmem:[%s2 + $0x610] sm:$0xff]
      %v920 = vld [vmem:[%s2 + $0x618] sm:$0xff]
      %v921 = vld [vmem:[%s2 + $0x620] sm:$0xff]
      %v922 = vld [vmem:[%s2 + $0x628] sm:$0xff]
      %v923 = vld [vmem:[%s2 + $0x630] sm:$0xff]
      %v924 = vld [vmem:[%s2 + $0x638] sm:$0xff]
      %v925 = vld [vmem:[%s2 + $0x640] sm:$0xff]
      %v926 = vld [vmem:[%s2 + $0x648] sm:$0xff]
      %v927 = vld [vmem:[%s2 + $0x650] sm:$0xff]
      %v928 = vld [vmem:[%s2 + $0x658] sm:$0xff]
      %v929 = vld [vmem:[%s2 + $0x660] sm:$0xff]
      %v930 = vld [vmem:[%s2 + $0x668] sm:$0xff]
      %v931 = vld [vmem:[%s2 + $0x670] sm:$0xff]
      %v932 = vld [vmem:[%s2 + $0x678] sm:$0xff]
      %v933 = vld [vmem:[%s2 + $0x680] sm:$0xff]
      %v934 = vld [vmem:[%s2 + $0x688] sm:$0xff]
      %v935 = vld [vmem:[%s2 + $0x690] sm:$0xff]
      %v936 = vld [vmem:[%s2 + $0x698] sm:$0xff]
      %v937 = vld [vmem:[%s2 + $0x6a0] sm:$0xff]
      %v938 = vld [vmem:[%s2 + $0x6a8] sm:$0xff]
      %v939 = vld [vmem:[%s2 + $0x6b0] sm:$0xff]
      %v940 = vld [vmem:[%s2 + $0x6b8] sm:$0xff]
      %v941 = vld [vmem:[%s2 + $0x6c0] sm:$0xff]
      %v942 = vld [vmem:[%s2 + $0x6c8] sm:$0xff]
      %v943 = vld [vmem:[%s2 + $0x6d0] sm:$0xff]
      %v944 = vld [vmem:[%s2 + $0x6d8] sm:$0xff]
      %v945 = vld [vmem:[%s2 + $0x6e0] sm:$0xff]
      %v946 = vld [vmem:[%s2 + $0x6e8] sm:$0xff]
      %v947 = vld [vmem:[%s2 + $0x6f0] sm:$0xff]
      %v948 = vld [vmem:[%s2 + $0x6f8] sm:$0xff]
      %v949 = vld [vmem:[%s2 + $0x700] sm:$0xff]
      %v950 = vld [vmem:[%s2 + $0x708] sm:$0xff]
      %v951 = vld [vmem:[%s2 + $0x710] sm:$0xff]
      %v952 = vld [vmem:[%s2 + $0x718] sm:$0xff]
      %v953 = vld [vmem:[%s2 + $0x720] sm:$0xff]
      %v954 = vld [vmem:[%s2 + $0x728] sm:$0xff]
      %v955 = vld [vmem:[%s2 + $0x730] sm:$0xff]
      %v956 = vld [vmem:[%s2 + $0x738] sm:$0xff]
      %v957 = vld [vmem:[%s2 + $0x740] sm:$0xff]
      %v958 = vld [vmem:[%s2 + $0x748] sm:$0xff]
      %v959 = vld [vmem:[%s2 + $0x750] sm:$0xff]
      %v960 = vld [vmem:[%s2 + $0x758] sm:$0xff]
      %v961 = vld [vmem:[%s2 + $0x760] sm:$0xff]
      %v962 = vld [vmem:[%s2 + $0x768] sm:$0xff]
      %v963 = vld [vmem:[%s2 + $0x770] sm:$0xff]
      %v964 = vld [vmem:[%s2 + $0x778] sm:$0xff]
      %v965 = vld [vmem:[%s2 + $0x780] sm:$0xff]
      %v966 = vld [vmem:[%s2 + $0x788] sm:$0xff]
      %v967 = vld [vmem:[%s2 + $0x790] sm:$0xff]
      %v968 = vld [vmem:[%s2 + $0x798] sm:$0xff]
      %v969 = vld [vmem:[%s2 + $0x7a0] sm:$0xff]
      %v970 = vld [vmem:[%s2 + $0x7a8] sm:$0xff]
      %v971 = vld [vmem:[%s2 + $0x7b0] sm:$0xff]
      %v972 = vld [vmem:[%s2 + $0x7b8] sm:$0xff]
      %v973 = vld [vmem:[%s2 + $0x7c0] sm:$0xff]
      %s974 = scalar_lea.vmem %s2, 1992
      %v975 = vld [vmem:[%s974] ss:$8 sm:$0x7]
      %s976 = scalar_lea.vmem %s2, 2016
      %v977 = vld [vmem:[%s976] ss:$8 sm:$0x7]
      %v978 = vld [vmem:[%s2 + $0x7f8] sm:$0xff]
      %v979 = vld [vmem:[%s2 + $0x800] sm:$0xff]
      %v980 = vld [vmem:[%s2 + $0x810] sm:$0xff]
      %v981 = vld [vmem:[%s2 + $0x818] sm:$0xff]
      %v982 = vld [vmem:[%s2 + $0x828] sm:$0xff]
      %v983 = vld [vmem:[%s2 + $0x830] sm:$0xff]
      %v984 = vld [vmem:[%s2 + $0x840] sm:$0xff]
      %v985 = vld [vmem:[%s2 + $0x848] sm:$0xff]
      %v986 = vld [vmem:[%s2 + $0x858] sm:$0xff]
      %v987 = vld [vmem:[%s2 + $0x860] sm:$0xff]
      %v988 = vld [vmem:[%s2 + $0x870] sm:$0xff]
      %v989 = vld [vmem:[%s2 + $0x878] sm:$0xff]
      %v990 = vld [vmem:[%s2 + $0x888] sm:$0xff]
      %v991 = vld [vmem:[%s2 + $0x890] sm:$0xff]
      %v992 = vld [vmem:[%s2 + $0x8a0] sm:$0xff]
      %v993 = vld [vmem:[%s2 + $0x8a8] sm:$0xff]
      %v994 = vld [vmem:[%s2 + $0x8b8] sm:$0xff]
      %v995 = vld [vmem:[%s2 + $0x8c0] sm:$0xff]
      %v996 = vld [vmem:[%s2 + $0x8d0] sm:$0xff]
      %v997 = vld [vmem:[%s2 + $0x8d8] sm:$0xff]
      %v998 = vld [vmem:[%s2 + $0x8e8] sm:$0xff]
      %v999 = vld [vmem:[%s2 + $0x8f0] sm:$0xff]
      %v1000 = vld [vmem:[%s2 + $0x900] sm:$0xff]
      %v1001 = vld [vmem:[%s2 + $0x908] sm:$0xff]
      %v1002 = vld [vmem:[%s2 + $0x918] sm:$0xff]
      %v1003 = vld [vmem:[%s2 + $0x920] sm:$0xff]
      %v1004 = vld [vmem:[%s2 + $0x930] sm:$0xff]
      %v1005 = vld [vmem:[%s2 + $0x938] sm:$0xff]
      %v1006 = vld [vmem:[%s2 + $0x948] sm:$0xff]
      %v1007 = vld [vmem:[%s2 + $0x950] sm:$0xff]
      %v1008 = vld [vmem:[%s2 + $0x960] sm:$0xff]
      %v1009 = vld [vmem:[%s2 + $0x968] sm:$0xff]
      %s1010 = scalar_lea.vmem %s2, 2424
      %v1011 = vld [vmem:[%s1010] ss:$8 sm:$0x7]
      %1012 = vmatpush.msra.mxu0 %v876
      %1013 = vmatpush.msra.mxu0 %v875
      %1014 = vmatpush.msra.mxu0 %v874
      %1015 = vmatpush.msra.mxu0 %v873
      %1016 = vmatpush.msra.mxu0 %v872
      %1017 = vmatpush.msra.mxu0 %v871
      %1018 = vmatpush.msra.mxu0 %v870
      %1019 = vmatpush.msra.mxu0 %v869
      %1020 = vmatpush.msra.mxu0 %v868
      %1021 = vmatpush.msra.mxu0 %v867
      %1022 = vmatpush.msra.mxu0 %v866
      %1023 = vmatpush.msra.mxu0 %v865
      %1024 = vmatpush.msra.mxu0 %v864
      %1025 = vmatpush.msra.mxu0 %v863
      %1026 = vmatpush.msra.mxu0 %v862
      %1027 = vmatpush.msra.mxu0 %v861
      %1028 = vmatmul.f32.gmra.mxu0 %v843
      %v1029 = vpop.f32.mrf.mxu0
      %v1030 = vadd.f32 0.0, %v1029
      %1031 = vmatmul.f32.gmra.mxu0 %v844
      %v1032 = vpop.f32.mrf.mxu0
      %v1033 = vadd.f32 0.0, %v1032
      %1034 = vmatmul.f32.gmra.mxu0 %v845
      %v1035 = vpop.f32.mrf.mxu0
      %v1036 = vadd.f32 0.0, %v1035
      %1037 = vmatmul.f32.gmra.mxu0 %v846
      %v1038 = vpop.f32.mrf.mxu0
      %v1039 = vadd.f32 0.0, %v1038
      %1040 = vmatmul.f32.gmra.mxu0 %v847
      %v1041 = vpop.f32.mrf.mxu0
      %v1042 = vadd.f32 0.0, %v1041
      %1043 = vmatmul.f32.gmra.mxu0 %v848
      %v1044 = vpop.f32.mrf.mxu0
      %v1045 = vadd.f32 0.0, %v1044
      %1046 = vmatmul.f32.gmra.mxu0 %v849
      %v1047 = vpop.f32.mrf.mxu0
      %v1048 = vadd.f32 0.0, %v1047
      %1049 = vmatmul.f32.gmra.mxu0 %v850
      %v1050 = vpop.f32.mrf.mxu0
      %v1051 = vadd.f32 0.0, %v1050
      %1052 = vmatmul.f32.gmra.mxu0 %v851
      %v1053 = vpop.f32.mrf.mxu0
      %v1054 = vadd.f32 0.0, %v1053
      %1055 = vmatmul.f32.gmra.mxu0 %v852
      %v1056 = vpop.f32.mrf.mxu0
      %v1057 = vadd.f32 0.0, %v1056
      %1058 = vmatmul.f32.gmra.mxu0 %v853
      %v1059 = vpop.f32.mrf.mxu0
      %v1060 = vadd.f32 0.0, %v1059
      %1061 = vmatmul.f32.gmra.mxu0 %v854
      %v1062 = vpop.f32.mrf.mxu0
      %v1063 = vadd.f32 0.0, %v1062
      %1064 = vmatmul.f32.gmra.mxu0 %v855
      %v1065 = vpop.f32.mrf.mxu0
      %v1066 = vadd.f32 0.0, %v1065
      %1067 = vmatmul.f32.gmra.mxu0 %v856
      %v1068 = vpop.f32.mrf.mxu0
      %v1069 = vadd.f32 0.0, %v1068
      %1070 = vmatmul.f32.gmra.mxu0 %v857
      %v1071 = vpop.f32.mrf.mxu0
      %v1072 = vadd.f32 0.0, %v1071
      %1073 = vmatmul.f32.gmra.mxu0 %v858
      %v1074 = vpop.f32.mrf.mxu0
      %v1075 = vadd.f32 0.0, %v1074
      %1076 = vdwg.mxu0
      %v1077 = vperm.slane %v877, 0
      %1078 = vmatpush.msra.mxu0 %v1075
      %1079 = vmatpush.msra.mxu0 %v1072
      %1080 = vmatpush.msra.mxu0 %v1069
      %1081 = vmatpush.msra.mxu0 %v1066
      %1082 = vmatpush.msra.mxu0 %v1063
      %1083 = vmatpush.msra.mxu0 %v1060
      %1084 = vmatpush.msra.mxu0 %v1057
      %1085 = vmatpush.msra.mxu0 %v1054
      %1086 = vmatpush.msra.mxu0 %v1051
      %1087 = vmatpush.msra.mxu0 %v1048
      %1088 = vmatpush.msra.mxu0 %v1045
      %1089 = vmatpush.msra.mxu0 %v1042
      %1090 = vmatpush.msra.mxu0 %v1039
      %1091 = vmatpush.msra.mxu0 %v1036
      %1092 = vmatpush.msra.mxu0 %v1033
      %1093 = vmatpush.msra.mxu0 %v1030
      %1094 = vmatmul.f32.gmra.mxu0 %v841
      %v1095 = vpop.f32.mrf.mxu0
      %v1096 = vadd.f32 %v1077, %v1095
      %1097 = vmatmul.f32.gmra.mxu0 %v842
      %v1098 = vpop.f32.mrf.mxu0
      %v1099 = vadd.f32 %v1077, %v1098
      %1100 = vdwg.mxu0
      %v1101 = vmax.f32 %v1096, 0.0
      %v1102 = vmax.f32 %v1099, 0.0
      %v1104 = vperm.slane %v975, 0
      %v1105 = vperm.slane %v975, 1
      %v1106 = vperm.slane %v975, 2
      %1110 = vmatpush.msra.mxu0 %v923
      %1111 = vmatpush.msra.mxu0 %v920
      %1112 = vmatpush.msra.mxu0 %v917
      %1113 = vmatpush.msra.mxu0 %v914
      %1114 = vmatpush.msra.mxu0 %v911
      %1115 = vmatpush.msra.mxu0 %v908
      %1116 = vmatpush.msra.mxu0 %v905
      %1117 = vmatpush.msra.mxu0 %v902
      %1118 = vmatpush.msra.mxu0 %v899
      %1119 = vmatpush.msra.mxu0 %v896
      %1120 = vmatpush.msra.mxu0 %v893
      %1121 = vmatpush.msra.mxu0 %v890
      %1122 = vmatpush.msra.mxu0 %v887
      %1123 = vmatpush.msra.mxu0 %v884
      %1124 = vmatpush.msra.mxu0 %v881
      %1125 = vmatpush.msra.mxu0 %v878
      %1126 = vmatmul.f32.gmra.mxu0 %v1101
      %v1127 = vpop.f32.mrf.mxu0
      %v1128 = vadd.f32 %v1104, %v1127
      %1129 = vmatmul.f32.gmra.mxu0 %v1102
      %v1130 = vpop.f32.mrf.mxu0
      %v1131 = vadd.f32 %v1104, %v1130
      %1132 = vdwg.mxu0
      %1133 = vmatpush.msra.mxu0 %v924
      %1134 = vmatpush.msra.mxu0 %v921
      %1135 = vmatpush.msra.mxu0 %v918
      %1136 = vmatpush.msra.mxu0 %v915
      %1137 = vmatpush.msra.mxu0 %v912
      %1138 = vmatpush.msra.mxu0 %v909
      %1139 = vmatpush.msra.mxu0 %v906
      %1140 = vmatpush.msra.mxu0 %v903
      %1141 = vmatpush.msra.mxu0 %v900
      %1142 = vmatpush.msra.mxu0 %v897
      %1143 = vmatpush.msra.mxu0 %v894
      %1144 = vmatpush.msra.mxu0 %v891
      %1145 = vmatpush.msra.mxu0 %v888
      %1146 = vmatpush.msra.mxu0 %v885
      %1147 = vmatpush.msra.mxu0 %v882
      %1148 = vmatpush.msra.mxu0 %v879
      %1149 = vmatmul.f32.gmra.mxu0 %v1101
      %v1150 = vpop.f32.mrf.mxu0
      %v1151 = vadd.f32 %v1105, %v1150
      %1152 = vmatmul.f32.gmra.mxu0 %v1102
      %v1153 = vpop.f32.mrf.mxu0
      %v1154 = vadd.f32 %v1105, %v1153
      %1155 = vdwg.mxu0
      %1156 = vmatpush.msra.mxu0 %v925
      %1157 = vmatpush.msra.mxu0 %v922
      %1158 = vmatpush.msra.mxu0 %v919
      %1159 = vmatpush.msra.mxu0 %v916
      %1160 = vmatpush.msra.mxu0 %v913
      %1161 = vmatpush.msra.mxu0 %v910
      %1162 = vmatpush.msra.mxu0 %v907
      %1163 = vmatpush.msra.mxu0 %v904
      %1164 = vmatpush.msra.mxu0 %v901
      %1165 = vmatpush.msra.mxu0 %v898
      %1166 = vmatpush.msra.mxu0 %v895
      %1167 = vmatpush.msra.mxu0 %v892
      %1168 = vmatpush.msra.mxu0 %v889
      %1169 = vmatpush.msra.mxu0 %v886
      %1170 = vmatpush.msra.mxu0 %v883
      %1171 = vmatpush.msra.mxu0 %v880
      %1172 = vmatmul.f32.gmra.mxu0 %v1101
      %v1173 = vpop.f32.mrf.mxu0
      %v1174 = vadd.f32 %v1106, %v1173
      %1175 = vmatmul.f32.gmra.mxu0 %v1102
      %v1176 = vpop.f32.mrf.mxu0
      %v1177 = vadd.f32 %v1106, %v1176
      %1178 = vdwg.mxu0
      %v1180 = vperm.slane %v977, 0
      %v1181 = vperm.slane %v977, 1
      %v1182 = vperm.slane %v977, 2
      %1186 = vmatpush.msra.mxu0 %v971
      %1187 = vmatpush.msra.mxu0 %v968
      %1188 = vmatpush.msra.mxu0 %v965
      %1189 = vmatpush.msra.mxu0 %v962
      %1190 = vmatpush.msra.mxu0 %v959
      %1191 = vmatpush.msra.mxu0 %v956
      %1192 = vmatpush.msra.mxu0 %v953
      %1193 = vmatpush.msra.mxu0 %v950
      %1194 = vmatpush.msra.mxu0 %v947
      %1195 = vmatpush.msra.mxu0 %v944
      %1196 = vmatpush.msra.mxu0 %v941
      %1197 = vmatpush.msra.mxu0 %v938
      %1198 = vmatpush.msra.mxu0 %v935
      %1199 = vmatpush.msra.mxu0 %v932
      %1200 = vmatpush.msra.mxu0 %v929
      %1201 = vmatpush.msra.mxu0 %v926
      %1202 = vmatmul.f32.gmra.mxu0 %v677
      %v1203 = vpop.f32.mrf.mxu0
      %v1204 = vadd.f32 %v1180, %v1203
      %1205 = vmatmul.f32.gmra.mxu0 %v678
      %v1206 = vpop.f32.mrf.mxu0
      %v1207 = vadd.f32 %v1180, %v1206
      %1208 = vdwg.mxu0
      %1209 = vmatpush.msra.mxu0 %v972
      %1210 = vmatpush.msra.mxu0 %v969
      %1211 = vmatpush.msra.mxu0 %v966
      %1212 = vmatpush.msra.mxu0 %v963
      %1213 = vmatpush.msra.mxu0 %v960
      %1214 = vmatpush.msra.mxu0 %v957
      %1215 = vmatpush.msra.mxu0 %v954
      %1216 = vmatpush.msra.mxu0 %v951
      %1217 = vmatpush.msra.mxu0 %v948
      %1218 = vmatpush.msra.mxu0 %v945
      %1219 = vmatpush.msra.mxu0 %v942
      %1220 = vmatpush.msra.mxu0 %v939
      %1221 = vmatpush.msra.mxu0 %v936
      %1222 = vmatpush.msra.mxu0 %v933
      %1223 = vmatpush.msra.mxu0 %v930
      %1224 = vmatpush.msra.mxu0 %v927
      %1225 = vmatmul.f32.gmra.mxu0 %v677
      %v1226 = vpop.f32.mrf.mxu0
      %v1227 = vadd.f32 %v1181, %v1226
      %1228 = vmatmul.f32.gmra.mxu0 %v678
      %v1229 = vpop.f32.mrf.mxu0
      %v1230 = vadd.f32 %v1181, %v1229
      %1231 = vdwg.mxu0
      %1232 = vmatpush.msra.mxu0 %v973
      %1233 = vmatpush.msra.mxu0 %v970
      %1234 = vmatpush.msra.mxu0 %v967
      %1235 = vmatpush.msra.mxu0 %v964
      %1236 = vmatpush.msra.mxu0 %v961
      %1237 = vmatpush.msra.mxu0 %v958
      %1238 = vmatpush.msra.mxu0 %v955
      %1239 = vmatpush.msra.mxu0 %v952
      %1240 = vmatpush.msra.mxu0 %v949
      %1241 = vmatpush.msra.mxu0 %v946
      %1242 = vmatpush.msra.mxu0 %v943
      %1243 = vmatpush.msra.mxu0 %v940
      %1244 = vmatpush.msra.mxu0 %v937
      %1245 = vmatpush.msra.mxu0 %v934
      %1246 = vmatpush.msra.mxu0 %v931
      %1247 = vmatpush.msra.mxu0 %v928
      %1248 = vmatmul.f32.gmra.mxu0 %v677
      %v1249 = vpop.f32.mrf.mxu0
      %v1250 = vadd.f32 %v1182, %v1249
      %1251 = vmatmul.f32.gmra.mxu0 %v678
      %v1252 = vpop.f32.mrf.mxu0
      %v1253 = vadd.f32 %v1182, %v1252
      %1254 = vdwg.mxu0
      %v1255 = vadd.f32 %v1128, %v1204
      %v1256 = vadd.f32 %v1131, %v1207
      %v1257 = vxor.u32 %v1255, 2147483648
      %v1258 = vxor.u32 %v1256, 2147483648
      %v1259 = vmul.f32 %v1257, 1.442695
      %v1260 = vpow.pop %v1259
      %v1261 = vmul.f32 %v1258, 1.442695
      %v1262 = vpow.pop %v1261
      %v1263 = vadd.f32 %v1260, 1.0
      %v1264 = vadd.f32 %v1262, 1.0
      %v1265 = vrcp.pop %v1263
      %v1266 = vmul.f32 %v1263, %v1265
      %v1267 = vsub.f32 1.0, %v1266
      %v1268 = vmul.f32 %v1265, %v1267
      %v1269 = vadd.f32 %v1265, %v1268
      %vm1270 = vweird.f32 %v1263
      %vm1271 = vweird.f32 %v1265
      %vm1272 = vmor %vm1270, %vm1271
      %v1273 = vsel %vm1272, %v1265, %v1269
      %v1274 = vand.u32 2147483647, %v1263
      %vm1275 = vcmp.eq.f32.partialorder %v1274, 8.507059e+37
      %v1276 = vand.u32 %v1263, 2147483648
      %v1277 = vor.u32 1.1754944e-38, %v1276
      %v1278 = vsel %vm1275, %v1277, %v1273
      %v1279 = vmul.f32 1.0, %v1278
      %v1280 = vrcp.pop %v1264
      %v1281 = vmul.f32 %v1264, %v1280
      %v1282 = vsub.f32 1.0, %v1281
      %v1283 = vmul.f32 %v1280, %v1282
      %v1284 = vadd.f32 %v1280, %v1283
      %vm1285 = vweird.f32 %v1264
      %vm1286 = vweird.f32 %v1280
      %vm1287 = vmor %vm1285, %vm1286
      %v1288 = vsel %vm1287, %v1280, %v1284
      %v1289 = vand.u32 2147483647, %v1264
      %vm1290 = vcmp.eq.f32.partialorder %v1289, 8.507059e+37
      %v1291 = vand.u32 %v1264, 2147483648
      %v1292 = vor.u32 1.1754944e-38, %v1291
      %v1293 = vsel %vm1290, %v1292, %v1288
      %v1294 = vmul.f32 1.0, %v1293
      %v1295 = vadd.f32 %v1151, %v1227
      %v1296 = vadd.f32 %v1154, %v1230
      %v1297 = vxor.u32 %v1295, 2147483648
      %v1298 = vxor.u32 %v1296, 2147483648
      %v1299 = vmul.f32 %v1297, 1.442695
      %v1300 = vpow.pop %v1299
      %v1301 = vmul.f32 %v1298, 1.442695
      %v1302 = vpow.pop %v1301
      %v1303 = vadd.f32 %v1300, 1.0
      %v1304 = vadd.f32 %v1302, 1.0
      %v1305 = vrcp.pop %v1303
      %v1306 = vmul.f32 %v1303, %v1305
      %v1307 = vsub.f32 1.0, %v1306
      %v1308 = vmul.f32 %v1305, %v1307
      %v1309 = vadd.f32 %v1305, %v1308
      %vm1310 = vweird.f32 %v1303
      %vm1311 = vweird.f32 %v1305
      %vm1312 = vmor %vm1310, %vm1311
      %v1313 = vsel %vm1312, %v1305, %v1309
      %v1314 = vand.u32 2147483647, %v1303
      %vm1315 = vcmp.eq.f32.partialorder %v1314, 8.507059e+37
      %v1316 = vand.u32 %v1303, 2147483648
      %v1317 = vor.u32 1.1754944e-38, %v1316
      %v1318 = vsel %vm1315, %v1317, %v1313
      %v1319 = vmul.f32 1.0, %v1318
      %v1320 = vrcp.pop %v1304
      %v1321 = vmul.f32 %v1304, %v1320
      %v1322 = vsub.f32 1.0, %v1321
      %v1323 = vmul.f32 %v1320, %v1322
      %v1324 = vadd.f32 %v1320, %v1323
      %vm1325 = vweird.f32 %v1304
      %vm1326 = vweird.f32 %v1320
      %vm1327 = vmor %vm1325, %vm1326
      %v1328 = vsel %vm1327, %v1320, %v1324
      %v1329 = vand.u32 2147483647, %v1304
      %vm1330 = vcmp.eq.f32.partialorder %v1329, 8.507059e+37
      %v1331 = vand.u32 %v1304, 2147483648
      %v1332 = vor.u32 1.1754944e-38, %v1331
      %v1333 = vsel %vm1330, %v1332, %v1328
      %v1334 = vmul.f32 1.0, %v1333
      %v1335 = vmul.f32 %v1279, %v1250
      %v1336 = vmul.f32 %v1294, %v1253
      %v1337 = vadd.f32 %v1174, %v1335
      %v1338 = vadd.f32 %v1177, %v1336
      %v1339 = vtanh.pop %v1337
      %v1340 = vtanh.pop %v1338
      %v1341 = vsub.f32 1.0, %v1319
      %v1342 = vsub.f32 1.0, %v1334
      %v1343 = vmul.f32 %v1341, %v1339
      %v1344 = vmul.f32 %v1342, %v1340
      %v1345 = vmul.f32 %v1319, %v677
      %v1346 = vmul.f32 %v1334, %v678
      %v1347 = vadd.f32 %v1343, %v1345
      %v1348 = vadd.f32 %v1344, %v1346
      %v1350 = vperm.slane %v1011, 0
      %v1351 = vperm.slane %v1011, 1
      %1354 = vmatpush.msra.mxu0 %v1008
      %1355 = vmatpush.msra.mxu0 %v1006
      %1356 = vmatpush.msra.mxu0 %v1004
      %1357 = vmatpush.msra.mxu0 %v1002
      %1358 = vmatpush.msra.mxu0 %v1000
      %1359 = vmatpush.msra.mxu0 %v998
      %1360 = vmatpush.msra.mxu0 %v996
      %1361 = vmatpush.msra.mxu0 %v994
      %1362 = vmatpush.msra.mxu0 %v992
      %1363 = vmatpush.msra.mxu0 %v990
      %1364 = vmatpush.msra.mxu0 %v988
      %1365 = vmatpush.msra.mxu0 %v986
      %1366 = vmatpush.msra.mxu0 %v984
      %1367 = vmatpush.msra.mxu0 %v982
      %1368 = vmatpush.msra.mxu0 %v980
      %1369 = vmatpush.msra.mxu0 %v978
      %1370 = vmatmul.f32.gmra.mxu0 %v1347
      %v1371 = vpop.f32.mrf.mxu0
      %v1372 = vadd.f32 %v1350, %v1371
      %1373 = vmatmul.f32.gmra.mxu0 %v1348
      %v1374 = vpop.f32.mrf.mxu0
      %v1375 = vadd.f32 %v1350, %v1374
      %1376 = vdwg.mxu0
      %1377 = vmatpush.msra.mxu0 %v1009
      %1378 = vmatpush.msra.mxu0 %v1007
      %1379 = vmatpush.msra.mxu0 %v1005
      %1380 = vmatpush.msra.mxu0 %v1003
      %1381 = vmatpush.msra.mxu0 %v1001
      %1382 = vmatpush.msra.mxu0 %v999
      %1383 = vmatpush.msra.mxu0 %v997
      %1384 = vmatpush.msra.mxu0 %v995
      %1385 = vmatpush.msra.mxu0 %v993
      %1386 = vmatpush.msra.mxu0 %v991
      %1387 = vmatpush.msra.mxu0 %v989
      %1388 = vmatpush.msra.mxu0 %v987
      %1389 = vmatpush.msra.mxu0 %v985
      %1390 = vmatpush.msra.mxu0 %v983
      %1391 = vmatpush.msra.mxu0 %v981
      %1392 = vmatpush.msra.mxu0 %v979
      %1393 = vmatmul.f32.gmra.mxu0 %v1347
      %v1394 = vpop.f32.mrf.mxu0
      %v1395 = vadd.f32 %v1351, %v1394
      %1396 = vmatmul.f32.gmra.mxu0 %v1348
      %v1397 = vpop.f32.mrf.mxu0
      %v1398 = vadd.f32 %v1351, %v1397
      %1399 = vdwg.mxu0
      %v1400 = vxor.u32 %v1372, 2147483648
      %v1401 = vxor.u32 %v1395, 2147483648
      %v1402 = vxor.u32 %v1375, 2147483648
      %v1403 = vxor.u32 %v1398, 2147483648
      %v1404 = vmul.f32 %v1400, 1.442695
      %v1405 = vpow.pop %v1404
      %v1406 = vmul.f32 %v1401, 1.442695
      %v1407 = vpow.pop %v1406
      %v1408 = vmul.f32 %v1402, 1.442695
      %v1409 = vpow.pop %v1408
      %v1410 = vmul.f32 %v1403, 1.442695
      %v1411 = vpow.pop %v1410
      %v1412 = vadd.f32 %v1405, 1.0
      %v1413 = vadd.f32 %v1407, 1.0
      %v1414 = vadd.f32 %v1409, 1.0
      %v1415 = vadd.f32 %v1411, 1.0
      %v1416 = vrcp.pop %v1412
      %v1417 = vmul.f32 %v1412, %v1416
      %v1418 = vsub.f32 1.0, %v1417
      %v1419 = vmul.f32 %v1416, %v1418
      %v1420 = vadd.f32 %v1416, %v1419
      %vm1421 = vweird.f32 %v1412
      %vm1422 = vweird.f32 %v1416
      %vm1423 = vmor %vm1421, %vm1422
      %v1424 = vsel %vm1423, %v1416, %v1420
      %v1425 = vand.u32 2147483647, %v1412
      %vm1426 = vcmp.eq.f32.partialorder %v1425, 8.507059e+37
      %v1427 = vand.u32 %v1412, 2147483648
      %v1428 = vor.u32 1.1754944e-38, %v1427
      %v1429 = vsel %vm1426, %v1428, %v1424
      %v1430 = vmul.f32 1.0, %v1429
      %v1431 = vrcp.pop %v1413
      %v1432 = vmul.f32 %v1413, %v1431
      %v1433 = vsub.f32 1.0, %v1432
      %v1434 = vmul.f32 %v1431, %v1433
      %v1435 = vadd.f32 %v1431, %v1434
      %vm1436 = vweird.f32 %v1413
      %vm1437 = vweird.f32 %v1431
      %vm1438 = vmor %vm1436, %vm1437
      %v1439 = vsel %vm1438, %v1431, %v1435
      %v1440 = vand.u32 2147483647, %v1413
      %vm1441 = vcmp.eq.f32.partialorder %v1440, 8.507059e+37
      %v1442 = vand.u32 %v1413, 2147483648
      %v1443 = vor.u32 1.1754944e-38, %v1442
      %v1444 = vsel %vm1441, %v1443, %v1439
      %v1445 = vmul.f32 1.0, %v1444
      %v1446 = vrcp.pop %v1414
      %v1447 = vmul.f32 %v1414, %v1446
      %v1448 = vsub.f32 1.0, %v1447
      %v1449 = vmul.f32 %v1446, %v1448
      %v1450 = vadd.f32 %v1446, %v1449
      %vm1451 = vweird.f32 %v1414
      %vm1452 = vweird.f32 %v1446
      %vm1453 = vmor %vm1451, %vm1452
      %v1454 = vsel %vm1453, %v1446, %v1450
      %v1455 = vand.u32 2147483647, %v1414
      %vm1456 = vcmp.eq.f32.partialorder %v1455, 8.507059e+37
      %v1457 = vand.u32 %v1414, 2147483648
      %v1458 = vor.u32 1.1754944e-38, %v1457
      %v1459 = vsel %vm1456, %v1458, %v1454
      %v1460 = vmul.f32 1.0, %v1459
      %v1461 = vrcp.pop %v1415
      %v1462 = vmul.f32 %v1415, %v1461
      %v1463 = vsub.f32 1.0, %v1462
      %v1464 = vmul.f32 %v1461, %v1463
      %v1465 = vadd.f32 %v1461, %v1464
      %vm1466 = vweird.f32 %v1415
      %vm1467 = vweird.f32 %v1461
      %vm1468 = vmor %vm1466, %vm1467
      %v1469 = vsel %vm1468, %v1461, %v1465
      %v1470 = vand.u32 2147483647, %v1415
      %vm1471 = vcmp.eq.f32.partialorder %v1470, 8.507059e+37
      %v1472 = vand.u32 %v1415, 2147483648
      %v1473 = vor.u32 1.1754944e-38, %v1472
      %v1474 = vsel %vm1471, %v1473, %v1469
      %v1475 = vmul.f32 1.0, %v1474
      %v1476 = vmul.f32 %v859, %v1430
      %v1477 = vmul.f32 %v860, %v1460
      %1478 = vmatpush.msra.mxu0 0.0
      %1479 = vmatpush.msra.mxu0 0.0
      %1480 = vmatpush.msra.mxu0 0.0
      %1481 = vmatpush.msra.mxu0 0.0
      %1482 = vmatpush.msra.mxu0 0.0
      %1483 = vmatpush.msra.mxu0 0.0
      %1484 = vmatpush.msra.mxu0 0.0
      %1485 = vmatpush.msra.mxu0 0.0
      %1486 = vmatpush.msra.mxu0 0.0
      %1487 = vmatpush.msra.mxu0 0.0
      %1488 = vmatpush.msra.mxu0 0.0
      %1489 = vmatpush.msra.mxu0 0.0
      %1490 = vmatpush.msra.mxu0 0.0
      %1491 = vmatpush.msra.mxu0 0.0
      %1492 = vmatpush.msra.mxu0 %v1477
      %1493 = vmatpush.msra.mxu0 %v1476
      %1494 = vmatmul.f32.gmra.mxu0 %v810
      %v1495 = vpop.f32.mrf.mxu0
      %v1496 = vadd.f32 0.0, %v1495
      %1497 = vmatmul.f32.gmra.mxu0 %v810
      %v1498 = vpop.f32.mrf.mxu0
      %v1499 = vadd.f32 0.0, %v1498
      %1500 = vdwg.mxu0
      %v1501 = vmul.f32 %v1445, %v1496
      %v1502 = vmul.f32 %v1475, %v1499
      %1503 = vadd.xlane.f32.xlu0 %v1501
      %v1504 = vpop.xlane.xlu0 %1503
      %1505 = vadd.xlane.f32.xlu0 %v1502
      %v1506 = vpop.xlane.xlu0 %1505
      %v1507 = vlaneseq
      %v1508 = vand.u32 %v1507, 127
      %vm1509 = vcmp.eq.s32.totalorder %v1508, 64
      %v1510 = vsel %vm1509, %v838, %v1347
      %v1511 = vsel %vm1509, %v840, %v1348
      %vm1512 = vcmp.eq.s32.totalorder %v1508, 65
      %v1513 = vsel %vm1512, %v1504, %v1510
      %v1514 = vsel %vm1512, %v1506, %v1511
      %1515 = vst [vmem:[%s170] sm:$0xff] %v1513
      %1516 = vst [vmem:[%s170 + $0x8] sm:$0xff] %v1514
      %p1517 = scmp.lt.s32.totalorder %s14, 1
      %s1518 = scalar_select %p1517, %s14, 1
      %s1519 = smul.addr %s1518, 2
      %s1520 = smul.addr %s1519, 8
      %s1521 = scalar_lea.vmem %s3, %s1520
      // Predicated region
      $region33: #{pigwn_forward.1} parent=31 // pred_check
        %p1522 = pneg %p100
      $region34: #{pigwn_forward.1} parent=31 // pred_check_branch
        %1524 = sbr.rel (%p1522) target = $region36
      $region35: #{pigwn_forward.1} parent=31 // pred_region
        _
      $region36: #{pigwn_forward.1} parent=31 // pred_fallthru
        _
    $region32: #{pigwn_forward.1} parent=5 // pred_fallthru
      _
    %p1525 = scmp.le.s32.totalorder 2, %s9
    // Predicated region
    $region37: #{pigwn_forward.1} parent=5 // pred_check
      %p1526 = pneg %p1525
    $region38: #{pigwn_forward.1} parent=5 // pred_check_branch
      %1528 = sbr.rel (%p1526) target = $region40
    $region39: #{pigwn_forward.1} parent=5 // pred_region
      %s1529 = ssub.s32 %s9, 2
      // Predicated region
      $region41: #{pigwn_forward.1} parent=39 // pred_check
        %p1530 = pneg %p106
      $region42: #{pigwn_forward.1} parent=39 // pred_check_branch
        %1532 = sbr.rel (%p1530) target = $region44
      $region43: #{pigwn_forward.1} parent=39 // pred_region
        %p1533 = scmp.lt.s32.totalorder %s15, 1
        %s1534 = scalar_select %p1533, %s15, 1
        %s1535 = smul.addr %s1534, 2
        %s1536 = smul.addr %s1535, 8
        %s1537 = scalar_lea.vmem %s3, %s1536
      $region44: #{pigwn_forward.1} parent=39 // pred_fallthru
        _
    $region40: #{pigwn_forward.1} parent=5 // pred_fallthru
      _
  $region6: #{pigwn_forward.1} parent=0 // loop_footer
    %s13 = sadd.s32 1, %s9
  $region7: #{pigwn_forward.1} parent=0 // loop_footer_branch
    %8 = sbr.rel target = $region3
  $region8: #{pigwn_forward.1} parent=0 // loop_exit
    _

</llo_original>
